<compile_context>
chip_gen: v7x
topology: tpu7x:2x2x1
jax: 0.10.0
libtpu: 0.0.40
codegen_flags: <defaults>
</compile_context>

<pallas_src>
import jax
import jax.numpy as jnp
from jax.experimental import pallas as pl
from jax.experimental.pallas import tpu as pltpu


def decoder_kernel(z_ref, w1_ref, b1_ref, w2_ref, b2_ref,
                   w3_ref, b3_ref, w4_ref, b4_ref, out_ref):
    # Activations stay f32; only the matmul inputs are cast to bf16 so the
    # MXU runs bf16 x bf16 -> f32.
    x = z_ref[...]                                                     # (TB, latent) f32

    h = jnp.dot(x.astype(jnp.bfloat16), w1_ref[...],
                preferred_element_type=jnp.float32) + b1_ref[...]
    h = jnp.maximum(h, 0.0)                                            # ReLU (f32)

    h = jnp.dot(h.astype(jnp.bfloat16), w2_ref[...],
                preferred_element_type=jnp.float32) + b2_ref[...]
    h = jnp.maximum(h, 0.0)

    h = jnp.dot(h.astype(jnp.bfloat16), w3_ref[...],
                preferred_element_type=jnp.float32) + b3_ref[...]
    h = jnp.maximum(h, 0.0)

    logits = jnp.dot(h.astype(jnp.bfloat16), w4_ref[...],
                     preferred_element_type=jnp.float32) + b4_ref[...]
    out_ref[...] = jax.nn.sigmoid(logits)                              # (TB, 896) f32


def decoder_forward(z, params):
    """z: (B, latent_dim) float32 -> (B, 784) float32."""
    w1, b1, w2, b2, w3, b3, w4, b4 = params
    B, latent = z.shape
    out_dim = w4.shape[1]                      # 784

    # --- lane-align the final layer (784 -> 896 = 7*128) -------------------
    out_pad = ((out_dim + 127) // 128) * 128
    if out_pad != out_dim:
        w4 = jnp.pad(w4, ((0, 0), (0, out_pad - out_dim)))
        b4 = jnp.pad(b4, ((0, 0), (0, out_pad - out_dim)))

    # --- bf16 weight storage (f32 accumulation inside the kernel) ----------
    w1b = w1.astype(jnp.bfloat16)
    w2b = w2.astype(jnp.bfloat16)
    w3b = w3.astype(jnp.bfloat16)
    w4b = w4.astype(jnp.bfloat16)

    # --- batch tiling: grid over batch, weights constant-index -------------
    if B <= 256:
        TB = max(8, ((B + 7) // 8) * 8)        # single tile, sublane-aligned
        B_pad = TB
    else:
        TB = 256
        B_pad = ((B + 255) // 256) * 256
    z_in = jnp.pad(z, ((0, B_pad - B), (0, 0))) if B_pad != B else z
    grid = (B_pad // TB,)

    act_spec = pl.BlockSpec((TB, latent), lambda i: (i, 0),
                            memory_space=pltpu.VMEM)
    out_spec = pl.BlockSpec((TB, out_pad), lambda i: (i, 0),
                            memory_space=pltpu.VMEM)

    def const(a):   # whole-array block, same block for every grid step
        return pl.BlockSpec(a.shape, lambda i, _nd=a.ndim: (0,) * _nd,
                            memory_space=pltpu.VMEM)

    # --- advisory cost estimate ---------------------------------------------
    flops = 2 * B_pad * (latent * 64 + 64 * 128 + 128 * 512 + 512 * out_pad)
    bytes_accessed = (
        int(z_in.size) * 4
        + (int(w1b.size) + int(w2b.size) + int(w3b.size) + int(w4b.size)) * 2
        + (int(b1.size) + int(b2.size) + int(b3.size) + int(b4.size)) * 4
        + B_pad * out_pad * 4)
    transcendentals = B_pad * out_pad          # sigmoid

    out = pl.pallas_call(
        decoder_kernel,
        out_shape=jax.ShapeDtypeStruct((B_pad, out_pad), jnp.float32),
        grid=grid,
        in_specs=[act_spec,
                  const(w1b), const(b1),
                  const(w2b), const(b2),
                  const(w3b), const(b3),
                  const(w4b), const(b4)],
        out_specs=out_spec,
        compiler_params=pltpu.CompilerParams(
            dimension_semantics=("parallel",)),
        cost_estimate=pl.CostEstimate(flops=flops,
                                      transcendentals=transcendentals,
                                      bytes_accessed=bytes_accessed),
    )(z_in, w1b, b1, w2b, b2, w3b, b3, w4b, b4)

    return out[:B, :out_dim]


def init_params(key, latent_dim):
    """Deterministic synthetic parameters (weights (in,out), biases (1,out))."""
    dims = [latent_dim, 64, 128, 512, 784]
    params = []
    keys = jax.random.split(key, len(dims) - 1)
    for k, (din, dout) in zip(keys, zip(dims[:-1], dims[1:])):
        scale = 1.0 / jnp.sqrt(jnp.float32(din))
        w = jax.random.uniform(k, (din, dout), jnp.float32, -scale, scale)
        b = jnp.zeros((1, dout), jnp.float32)
        params += [w, b]
    return tuple(params)


def reference_forward(z, params):
    """Pure-JAX f32 reference (PyTorch semantics)."""
    w1, b1, w2, b2, w3, b3, w4, b4 = params
    x = jnp.maximum(z @ w1 + b1, 0.0)
    x = jnp.maximum(x @ w2 + b2, 0.0)
    x = jnp.maximum(x @ w3 + b3, 0.0)
    return jax.nn.sigmoid(x @ w4 + b4)


if __name__ == "__main__":
    key = jax.random.PRNGKey(0)
    k_z, k_p = jax.random.split(key)

    batch, latent_dim = 8, 16
    z = jax.random.normal(k_z, (batch, latent_dim), jnp.float32)
    params = init_params(k_p, latent_dim)

    out = jax.jit(decoder_forward)(z, params)
    out = jax.block_until_ready(out)

    ref = reference_forward(z, params)
    assert out.shape == (batch, 784)
    # bf16 weight storage / bf16 MXU inputs => relaxed tolerance vs f32 ref.
    assert jnp.allclose(out, ref, atol=1.5e-2, rtol=1.5e-2), (
        float(jnp.max(jnp.abs(out - ref))))

    print("KERNEL_OK")
</pallas_src>

<mosaic_0001>
module attributes {stable_mosaic.version = 11 : i64} {
  func.func @decoder_kernel(%arg0: i32, %arg1: memref<8x16xf32, #tpu.memory_space<vmem>>, %arg2: memref<16x64xbf16, #tpu.memory_space<vmem>>, %arg3: memref<1x64xf32, #tpu.memory_space<vmem>>, %arg4: memref<64x128xbf16, #tpu.memory_space<vmem>>, %arg5: memref<1x128xf32, #tpu.memory_space<vmem>>, %arg6: memref<128x512xbf16, #tpu.memory_space<vmem>>, %arg7: memref<1x512xf32, #tpu.memory_space<vmem>>, %arg8: memref<512x896xbf16, #tpu.memory_space<vmem>>, %arg9: memref<1x896xf32, #tpu.memory_space<vmem>>, %arg10: memref<8x896xf32, #tpu.memory_space<vmem>>) attributes {dimension_semantics = [#tpu.dimension_semantics<parallel>], iteration_bounds = array<i64: 1>, scalar_prefetch = 0 : i64, scratch_operands = 0 : i64, tpu.core_type = #tpu.core_type<tc>, window_params = [{transform_indices = @transform_0, window_bounds = array<i64: 8, 16>}, {pipeline_mode = #tpu.pipeline_mode<synchronous>, transform_indices = @transform_1, window_bounds = array<i64: 16, 64>}, {pipeline_mode = #tpu.pipeline_mode<synchronous>, transform_indices = @transform_2, window_bounds = array<i64: 1, 64>}, {pipeline_mode = #tpu.pipeline_mode<synchronous>, transform_indices = @transform_3, window_bounds = array<i64: 64, 128>}, {pipeline_mode = #tpu.pipeline_mode<synchronous>, transform_indices = @transform_4, window_bounds = array<i64: 1, 128>}, {pipeline_mode = #tpu.pipeline_mode<synchronous>, transform_indices = @transform_5, window_bounds = array<i64: 128, 512>}, {pipeline_mode = #tpu.pipeline_mode<synchronous>, transform_indices = @transform_6, window_bounds = array<i64: 1, 512>}, {pipeline_mode = #tpu.pipeline_mode<synchronous>, transform_indices = @transform_7, window_bounds = array<i64: 512, 896>}, {pipeline_mode = #tpu.pipeline_mode<synchronous>, transform_indices = @transform_8, window_bounds = array<i64: 1, 896>}, {transform_indices = @transform_9, window_bounds = array<i64: 8, 896>}]} {
    %c0 = arith.constant 0 : index
    %c0_0 = arith.constant 0 : index
    %0 = vector.load %arg1[%c0, %c0_0] : memref<8x16xf32, #tpu.memory_space<vmem>>, vector<8x16xf32>
    %1 = arith.truncf %0 : vector<8x16xf32> to vector<8x16xbf16>
    %c0_1 = arith.constant 0 : index
    %c0_2 = arith.constant 0 : index
    %2 = vector.load %arg2[%c0_1, %c0_2] : memref<16x64xbf16, #tpu.memory_space<vmem>>, vector<16x64xbf16>
    %cst = arith.constant dense<0.000000e+00> : vector<8x64xf32>
    %3 = tpu.matmul %1, %2, %cst {dimension_numbers = #tpu.dot_dimension_numbers<[1], [0], [0], [1], [0, 0, 1, 1], [], []>} : vector<8x16xbf16>, vector<16x64xbf16>, vector<8x64xf32> -> vector<8x64xf32>
    %c0_3 = arith.constant 0 : index
    %c0_4 = arith.constant 0 : index
    %4 = vector.load %arg3[%c0_3, %c0_4] : memref<1x64xf32, #tpu.memory_space<vmem>>, vector<1x64xf32>
    %5 = vector.broadcast %4 : vector<1x64xf32> to vector<8x64xf32>
    %6 = arith.addf %3, %5 : vector<8x64xf32>
    %cst_5 = arith.constant 0.000000e+00 : f32
    %7 = vector.broadcast %cst_5 : f32 to vector<8x64xf32>
    %8 = arith.maximumf %6, %7 : vector<8x64xf32>
    %9 = arith.truncf %8 : vector<8x64xf32> to vector<8x64xbf16>
    %c0_6 = arith.constant 0 : index
    %c0_7 = arith.constant 0 : index
    %10 = vector.load %arg4[%c0_6, %c0_7] : memref<64x128xbf16, #tpu.memory_space<vmem>>, vector<64x128xbf16>
    %cst_8 = arith.constant dense<0.000000e+00> : vector<8x128xf32>
    %11 = tpu.matmul %9, %10, %cst_8 {dimension_numbers = #tpu.dot_dimension_numbers<[1], [0], [0], [1], [0, 0, 1, 1], [], []>} : vector<8x64xbf16>, vector<64x128xbf16>, vector<8x128xf32> -> vector<8x128xf32>
    %c0_9 = arith.constant 0 : index
    %c0_10 = arith.constant 0 : index
    %12 = vector.load %arg5[%c0_9, %c0_10] : memref<1x128xf32, #tpu.memory_space<vmem>>, vector<1x128xf32>
    %13 = vector.broadcast %12 : vector<1x128xf32> to vector<8x128xf32>
    %14 = arith.addf %11, %13 : vector<8x128xf32>
    %cst_11 = arith.constant 0.000000e+00 : f32
    %15 = vector.broadcast %cst_11 : f32 to vector<8x128xf32>
    %16 = arith.maximumf %14, %15 : vector<8x128xf32>
    %17 = arith.truncf %16 : vector<8x128xf32> to vector<8x128xbf16>
    %c0_12 = arith.constant 0 : index
    %c0_13 = arith.constant 0 : index
    %18 = vector.load %arg6[%c0_12, %c0_13] : memref<128x512xbf16, #tpu.memory_space<vmem>>, vector<128x512xbf16>
    %cst_14 = arith.constant dense<0.000000e+00> : vector<8x512xf32>
    %19 = tpu.matmul %17, %18, %cst_14 {dimension_numbers = #tpu.dot_dimension_numbers<[1], [0], [0], [1], [0, 0, 1, 1], [], []>} : vector<8x128xbf16>, vector<128x512xbf16>, vector<8x512xf32> -> vector<8x512xf32>
    %c0_15 = arith.constant 0 : index
    %c0_16 = arith.constant 0 : index
    %20 = vector.load %arg7[%c0_15, %c0_16] : memref<1x512xf32, #tpu.memory_space<vmem>>, vector<1x512xf32>
    %21 = vector.broadcast %20 : vector<1x512xf32> to vector<8x512xf32>
    %22 = arith.addf %19, %21 : vector<8x512xf32>
    %cst_17 = arith.constant 0.000000e+00 : f32
    %23 = vector.broadcast %cst_17 : f32 to vector<8x512xf32>
    %24 = arith.maximumf %22, %23 : vector<8x512xf32>
    %25 = arith.truncf %24 : vector<8x512xf32> to vector<8x512xbf16>
    %c0_18 = arith.constant 0 : index
    %c0_19 = arith.constant 0 : index
    %26 = vector.load %arg8[%c0_18, %c0_19] : memref<512x896xbf16, #tpu.memory_space<vmem>>, vector<512x896xbf16>
    %cst_20 = arith.constant dense<0.000000e+00> : vector<8x896xf32>
    %27 = tpu.matmul %25, %26, %cst_20 {dimension_numbers = #tpu.dot_dimension_numbers<[1], [0], [0], [1], [0, 0, 1, 1], [], []>} : vector<8x512xbf16>, vector<512x896xbf16>, vector<8x896xf32> -> vector<8x896xf32>
    %c0_21 = arith.constant 0 : index
    %c0_22 = arith.constant 0 : index
    %28 = vector.load %arg9[%c0_21, %c0_22] : memref<1x896xf32, #tpu.memory_space<vmem>>, vector<1x896xf32>
    %29 = vector.broadcast %28 : vector<1x896xf32> to vector<8x896xf32>
    %30 = arith.addf %27, %29 : vector<8x896xf32>
    %31 = arith.negf %30 : vector<8x896xf32>
    %32 = math.exp %31 : vector<8x896xf32>
    %cst_23 = arith.constant 1.000000e+00 : f32
    %33 = vector.broadcast %cst_23 : f32 to vector<8x896xf32>
    %34 = arith.addf %33, %32 : vector<8x896xf32>
    %35 = arith.divf %33, %34 : vector<8x896xf32>
    %c0_24 = arith.constant 0 : index
    %c0_25 = arith.constant 0 : index
    %36 = vector.load %arg10[%c0_24, %c0_25] : memref<8x896xf32, #tpu.memory_space<vmem>>, vector<8x896xf32>
    tpu.vector_store %arg10[%c0_24, %c0_25], %35 {strides = array<i32>} : memref<8x896xf32, #tpu.memory_space<vmem>>, vector<8x896xf32>,
    return
  }
  func.func @transform_0(%arg0: i32) -> (i32, i32) {
    %c0_i32 = arith.constant 0 : i32
    %c0_i32_0 = arith.constant 0 : i32
    return %arg0, %c0_i32 : i32, i32
  }
  func.func @transform_1(%arg0: i32) -> (i32, i32) {
    %c0_i32 = arith.constant 0 : i32
    %c0_i32_0 = arith.constant 0 : i32
    %c0_i32_1 = arith.constant 0 : i32
    return %c0_i32, %c0_i32_0 : i32, i32
  }
  func.func @transform_2(%arg0: i32) -> (i32, i32) {
    %c0_i32 = arith.constant 0 : i32
    %c0_i32_0 = arith.constant 0 : i32
    %c0_i32_1 = arith.constant 0 : i32
    return %c0_i32, %c0_i32_0 : i32, i32
  }
  func.func @transform_3(%arg0: i32) -> (i32, i32) {
    %c0_i32 = arith.constant 0 : i32
    %c0_i32_0 = arith.constant 0 : i32
    %c0_i32_1 = arith.constant 0 : i32
    return %c0_i32, %c0_i32_0 : i32, i32
  }
  func.func @transform_4(%arg0: i32) -> (i32, i32) {
    %c0_i32 = arith.constant 0 : i32
    %c0_i32_0 = arith.constant 0 : i32
    %c0_i32_1 = arith.constant 0 : i32
    return %c0_i32, %c0_i32_0 : i32, i32
  }
  func.func @transform_5(%arg0: i32) -> (i32, i32) {
    %c0_i32 = arith.constant 0 : i32
    %c0_i32_0 = arith.constant 0 : i32
    %c0_i32_1 = arith.constant 0 : i32
    return %c0_i32, %c0_i32_0 : i32, i32
  }
  func.func @transform_6(%arg0: i32) -> (i32, i32) {
    %c0_i32 = arith.constant 0 : i32
    %c0_i32_0 = arith.constant 0 : i32
    %c0_i32_1 = arith.constant 0 : i32
    return %c0_i32, %c0_i32_0 : i32, i32
  }
  func.func @transform_7(%arg0: i32) -> (i32, i32) {
    %c0_i32 = arith.constant 0 : i32
    %c0_i32_0 = arith.constant 0 : i32
    %c0_i32_1 = arith.constant 0 : i32
    return %c0_i32, %c0_i32_0 : i32, i32
  }
  func.func @transform_8(%arg0: i32) -> (i32, i32) {
    %c0_i32 = arith.constant 0 : i32
    %c0_i32_0 = arith.constant 0 : i32
    %c0_i32_1 = arith.constant 0 : i32
    return %c0_i32, %c0_i32_0 : i32, i32
  }
  func.func @transform_9(%arg0: i32) -> (i32, i32) {
    %c0_i32 = arith.constant 0 : i32
    %c0_i32_0 = arith.constant 0 : i32
    return %arg0, %c0_i32 : i32, i32
  }
}

</mosaic_0001>

<llo_original>
// kernel: decoder_forward.1
$region0: #{decoder_forward.1}
  #allocation0 [shape = 'u32[]', space=smem, size = 0x4, offset = 0x4, fixed_abs, tag = 'smem constant byte address 0x4 - core index']
  #allocation1 [shape = 'u32[144,128]{1,0:T(1,128)}', space=vmem, size = 0x12000, scoped, tag = 'internal scratch']
  %s0 = inlined_call_operand.vmem [shape: f32[8,16], index: 0, kind: input, shape index: {}]
  %s1 = inlined_call_operand.vmem [shape: bf16[16,64], index: 1, kind: input, shape index: {}]
  %s2 = inlined_call_operand.vmem [shape: f32[1,64], index: 2, kind: input, shape index: {}]
  %s3 = inlined_call_operand.vmem [shape: bf16[64,128], index: 3, kind: input, shape index: {}]
  %s4 = inlined_call_operand.vmem [shape: f32[1,128], index: 4, kind: input, shape index: {}]
  %s5 = inlined_call_operand.vmem [shape: bf16[128,512], index: 5, kind: input, shape index: {}]
  %s6 = inlined_call_operand.vmem [shape: f32[1,512], index: 6, kind: input, shape index: {}]
  %s7 = inlined_call_operand.vmem [shape: bf16[512,896], index: 7, kind: input, shape index: {}]
  %s8 = inlined_call_operand.vmem [shape: f32[1,896], index: 8, kind: input, shape index: {}]
  %s9 = inlined_call_operand.hbm [shape: f32[8,896], index: 9, kind: output, shape index: {}]
  %s10 = sld [smem:[#allocation0]]
  $region46: #{decoder_forward.1} parent=0
    _
  %s12 = ssub.s32 1, %s10
  %s13 = scalar_select 0, %s12, %s10
  $region1: #{decoder_forward.1} parent=0
    #allocation2 [shape = 'u8[28672]{0}', space=vmem, size = 0x7000, scoped, tag = 'output window, operand 0, single buffered']
    #allocation3 [shape = 's32[1]{0}', space=sflag, size = 0x4, scoped, tag = 'scoped memory for decoder_forward.1']
    %14 = vsyncpa [#allocation3], 0
    // Predicated region
    $region2: #{decoder_forward.1} parent=1 // pred_check
      _
    $region3: #{decoder_forward.1} parent=1 // pred_check_branch
      %16 = sbr.rel (0) target = $region5
    $region4: #{decoder_forward.1} parent=1 // pred_region
      _
    $region5: #{decoder_forward.1} parent=1 // pred_fallthru
      _
    // Predicated region
    $region6: #{decoder_forward.1} parent=1 // pred_check
      _
    $region7: #{decoder_forward.1} parent=1 // pred_check_branch
      %18 = sbr.rel (0) target = $region9
    $region8: #{decoder_forward.1} parent=1 // pred_region
      _
    $region9: #{decoder_forward.1} parent=1 // pred_fallthru
      _
    // Predicated region
    $region10: #{decoder_forward.1} parent=1 // pred_check
      _
    $region11: #{decoder_forward.1} parent=1 // pred_check_branch
      %20 = sbr.rel (0) target = $region13
    $region12: #{decoder_forward.1} parent=1 // pred_region
      _
    $region13: #{decoder_forward.1} parent=1 // pred_fallthru
      _
    // Predicated region
    $region14: #{decoder_forward.1} parent=1 // pred_check
      _
    $region15: #{decoder_forward.1} parent=1 // pred_check_branch
      %22 = sbr.rel (0) target = $region17
    $region16: #{decoder_forward.1} parent=1 // pred_region
      _
    $region17: #{decoder_forward.1} parent=1 // pred_fallthru
      _
    // Predicated region
    $region18: #{decoder_forward.1} parent=1 // pred_check
      _
    $region19: #{decoder_forward.1} parent=1 // pred_check_branch
      %24 = sbr.rel (0) target = $region21
    $region20: #{decoder_forward.1} parent=1 // pred_region
      _
    $region21: #{decoder_forward.1} parent=1 // pred_fallthru
      _
    // Predicated region
    $region22: #{decoder_forward.1} parent=1 // pred_check
      _
    $region23: #{decoder_forward.1} parent=1 // pred_check_branch
      %26 = sbr.rel (0) target = $region25
    $region24: #{decoder_forward.1} parent=1 // pred_region
      _
    $region25: #{decoder_forward.1} parent=1 // pred_fallthru
      _
    // Predicated region
    $region26: #{decoder_forward.1} parent=1 // pred_check
      _
    $region27: #{decoder_forward.1} parent=1 // pred_check_branch
      %28 = sbr.rel (0) target = $region29
    $region28: #{decoder_forward.1} parent=1 // pred_region
      _
    $region29: #{decoder_forward.1} parent=1 // pred_fallthru
      _
    // Predicated region
    $region30: #{decoder_forward.1} parent=1 // pred_check
      _
    $region31: #{decoder_forward.1} parent=1 // pred_check_branch
      %30 = sbr.rel (0) target = $region33
    $region32: #{decoder_forward.1} parent=1 // pred_region
      _
    $region33: #{decoder_forward.1} parent=1 // pred_fallthru
      _
    // Predicated region
    $region34: #{decoder_forward.1} parent=1 // pred_check
      _
    $region35: #{decoder_forward.1} parent=1 // pred_check_branch
      %32 = sbr.rel (0) target = $region37
    $region36: #{decoder_forward.1} parent=1 // pred_region
      _
    $region37: #{decoder_forward.1} parent=1 // pred_fallthru
      _
    %v34 = vld [vmem:[%s0] sm:$0xff]
    %v35 = vpack.c.bf16 %v34, %v34
    %v36 = vld [vmem:[%s1] sm:$0xf]
    %v37 = vld [vmem:[%s1 + $0x4] sm:$0xf]
    %v38 = vld [vmem:[%s2] sm:$0x1]
    %v40 = vlaneseq
    %v41 = vshrl.u32 %v40, 7
    %v42 = vsub.s32 0, %v41
    %v43 = vrot.slane %v38, %v42
    %v47 = vunpack.c.l.b16 %v36
    %v48 = vunpack.c.l.b16 %v37
    %v49 = vpack.c.b16 %v48, %v47
    %vm51 = vcmask 130048
    %v53 = vsel %vm51, %v35, 0
    %55 = vmatprep.subr.bf16.mxu0 0
    %56 = vmatpush1.bf16.msra.mxu0 %v49
    %57 = vmatprep.subr.bf16.mxu0 0
    %58 = vmatpush1.bf16.msra.mxu0 0
    %59 = vmatprep.subr.bf16.mxu0 0
    %60 = vmatpush1.bf16.msra.mxu0 0
    %61 = vmatprep.subr.bf16.mxu0 0
    %62 = vmatpush1.bf16.msra.mxu0 0
    %63 = vmatprep.subr.bf16.mxu0 0
    %64 = vmatpush1.bf16.msra.mxu0 0
    %65 = vmatprep.subr.bf16.mxu0 0
    %66 = vmatpush1.bf16.msra.mxu0 0
    %67 = vmatprep.subr.bf16.mxu0 0
    %68 = vmatpush1.bf16.msra.mxu0 0
    %69 = vmatprep.subr.bf16.mxu0 0
    %70 = vmatpush1.bf16.msra.mxu0 0
    %71 = vmatprep.subr.bf16.mxu0 0
    %72 = vmatpush1.bf16.msra.mxu0 0
    %73 = vmatprep.subr.bf16.mxu0 0
    %74 = vmatpush1.bf16.msra.mxu0 0
    %75 = vmatprep.subr.bf16.mxu0 0
    %76 = vmatpush1.bf16.msra.mxu0 0
    %77 = vmatprep.subr.bf16.mxu0 0
    %78 = vmatpush1.bf16.msra.mxu0 0
    %79 = vmatprep.subr.bf16.mxu0 0
    %80 = vmatpush1.bf16.msra.mxu0 0
    %81 = vmatprep.subr.bf16.mxu0 0
    %82 = vmatpush1.bf16.msra.mxu0 0
    %83 = vmatprep.subr.bf16.mxu0 0
    %84 = vmatpush1.bf16.msra.mxu0 0
    %85 = vmatprep.subr.bf16.mxu0 0
    %86 = vmatpush1.bf16.msra.mxu0 0
    %87 = vmatprep.mubr.bf16.mxu0 0
    %88 = vmatmul.mubr.bf16.gmra.mrb[0].mxu0 %v53
    %v89 = vpop.f32.mrb[0].mxu0
    %v90 = vadd.f32 %v43, %v89
    %v91 = vpop.f32.mrb[0].mxu0
    %v92 = vpop.f32.mrb[0].mxu0
    %v93 = vpop.f32.mrb[0].mxu0
    %94 = vdwg.mxu0
    %v95 = vmax.f32 %v90, 0.0
    %v96 = vpack.c.bf16 %v95, %v95
    %v97 = vld [vmem:[%s3] sm:$0xf]
    %v98 = vld [vmem:[%s3 + $0x4] sm:$0xf]
    %v99 = vld [vmem:[%s3 + $0x8] sm:$0xf]
    %v100 = vld [vmem:[%s3 + $0xc] sm:$0xf]
    %v101 = vld [vmem:[%s3 + $0x10] sm:$0xf]
    %v102 = vld [vmem:[%s3 + $0x14] sm:$0xf]
    %v103 = vld [vmem:[%s3 + $0x18] sm:$0xf]
    %v104 = vld [vmem:[%s3 + $0x1c] sm:$0xf]
    %v105 = vld [vmem:[%s4] sm:$0x1]
    %v107 = vlaneseq
    %v108 = vshrl.u32 %v107, 7
    %v109 = vsub.s32 0, %v108
    %v110 = vrot.slane %v105, %v109
    %v120 = vunpack.c.l.b16 %v97
    %v121 = vunpack.c.l.b16 %v98
    %v122 = vunpack.c.l.b16 %v99
    %v123 = vunpack.c.l.b16 %v100
    %v124 = vunpack.c.l.b16 %v101
    %v125 = vunpack.c.l.b16 %v102
    %v126 = vunpack.c.l.b16 %v103
    %v127 = vunpack.c.l.b16 %v104
    %v128 = vpack.c.b16 %v121, %v120
    %v129 = vpack.c.b16 %v123, %v122
    %v130 = vpack.c.b16 %v125, %v124
    %v131 = vpack.c.b16 %v127, %v126
    %vm136 = vcmask 523264
    %v138 = vsel %vm136, %v96, 0
    %140 = vmatprep.subr.bf16.mxu0 0
    %141 = vmatpush1.bf16.msra.mxu0 %v128
    %142 = vmatprep.subr.bf16.mxu0 0
    %143 = vmatpush1.bf16.msra.mxu0 %v129
    %144 = vmatprep.subr.bf16.mxu0 0
    %145 = vmatpush1.bf16.msra.mxu0 %v130
    %146 = vmatprep.subr.bf16.mxu0 0
    %147 = vmatpush1.bf16.msra.mxu0 %v131
    %148 = vmatprep.subr.bf16.mxu0 0
    %149 = vmatpush1.bf16.msra.mxu0 0
    %150 = vmatprep.subr.bf16.mxu0 0
    %151 = vmatpush1.bf16.msra.mxu0 0
    %152 = vmatprep.subr.bf16.mxu0 0
    %153 = vmatpush1.bf16.msra.mxu0 0
    %154 = vmatprep.subr.bf16.mxu0 0
    %155 = vmatpush1.bf16.msra.mxu0 0
    %156 = vmatprep.subr.bf16.mxu0 0
    %157 = vmatpush1.bf16.msra.mxu0 0
    %158 = vmatprep.subr.bf16.mxu0 0
    %159 = vmatpush1.bf16.msra.mxu0 0
    %160 = vmatprep.subr.bf16.mxu0 0
    %161 = vmatpush1.bf16.msra.mxu0 0
    %162 = vmatprep.subr.bf16.mxu0 0
    %163 = vmatpush1.bf16.msra.mxu0 0
    %164 = vmatprep.subr.bf16.mxu0 0
    %165 = vmatpush1.bf16.msra.mxu0 0
    %166 = vmatprep.subr.bf16.mxu0 0
    %167 = vmatpush1.bf16.msra.mxu0 0
    %168 = vmatprep.subr.bf16.mxu0 0
    %169 = vmatpush1.bf16.msra.mxu0 0
    %170 = vmatprep.subr.bf16.mxu0 0
    %171 = vmatpush1.bf16.msra.mxu0 0
    %172 = vmatprep.mubr.bf16.mxu0 0
    %173 = vmatmul.mubr.bf16.gmra.mrb[0].mxu0 %v138
    %v174 = vpop.f32.mrb[0].mxu0
    %v175 = vadd.f32 %v110, %v174
    %v176 = vpop.f32.mrb[0].mxu0
    %v177 = vpop.f32.mrb[0].mxu0
    %v178 = vpop.f32.mrb[0].mxu0
    %179 = vdwg.mxu0
    %v180 = vmax.f32 %v175, 0.0
    %v181 = vpack.c.bf16 %v180, %v180
    %v182 = vld [vmem:[%s5] sm:$0xff]
    %v183 = vld [vmem:[%s5 + $0x8] sm:$0xff]
    %v184 = vld [vmem:[%s5 + $0x10] sm:$0xff]
    %v185 = vld [vmem:[%s5 + $0x18] sm:$0xff]
    %v186 = vld [vmem:[%s5 + $0x20] sm:$0xff]
    %v187 = vld [vmem:[%s5 + $0x28] sm:$0xff]
    %v188 = vld [vmem:[%s5 + $0x30] sm:$0xff]
    %v189 = vld [vmem:[%s5 + $0x38] sm:$0xff]
    %v190 = vld [vmem:[%s5 + $0x40] sm:$0xff]
    %v191 = vld [vmem:[%s5 + $0x48] sm:$0xff]
    %v192 = vld [vmem:[%s5 + $0x50] sm:$0xff]
    %v193 = vld [vmem:[%s5 + $0x58] sm:$0xff]
    %v194 = vld [vmem:[%s5 + $0x60] sm:$0xff]
    %v195 = vld [vmem:[%s5 + $0x68] sm:$0xff]
    %v196 = vld [vmem:[%s5 + $0x70] sm:$0xff]
    %v197 = vld [vmem:[%s5 + $0x78] sm:$0xff]
    %v198 = vld [vmem:[%s5 + $0x80] sm:$0xff]
    %v199 = vld [vmem:[%s5 + $0x88] sm:$0xff]
    %v200 = vld [vmem:[%s5 + $0x90] sm:$0xff]
    %v201 = vld [vmem:[%s5 + $0x98] sm:$0xff]
    %v202 = vld [vmem:[%s5 + $0xa0] sm:$0xff]
    %v203 = vld [vmem:[%s5 + $0xa8] sm:$0xff]
    %v204 = vld [vmem:[%s5 + $0xb0] sm:$0xff]
    %v205 = vld [vmem:[%s5 + $0xb8] sm:$0xff]
    %v206 = vld [vmem:[%s5 + $0xc0] sm:$0xff]
    %v207 = vld [vmem:[%s5 + $0xc8] sm:$0xff]
    %v208 = vld [vmem:[%s5 + $0xd0] sm:$0xff]
    %v209 = vld [vmem:[%s5 + $0xd8] sm:$0xff]
    %v210 = vld [vmem:[%s5 + $0xe0] sm:$0xff]
    %v211 = vld [vmem:[%s5 + $0xe8] sm:$0xff]
    %v212 = vld [vmem:[%s5 + $0xf0] sm:$0xff]
    %v213 = vld [vmem:[%s5 + $0xf8] sm:$0xff]
    %v214 = vld [vmem:[%s6] sm:$0xf]
    %v216 = vlaneseq
    %v217 = vshrl.u32 %v216, 7
    %v218 = vsub.s32 0, %v217
    %v219 = vrot.slane %v214, %v218
    %v220 = vlaneseq
    %v221 = vshrl.u32 %v220, 7
    %v222 = vsub.s32 1, %v221
    %v223 = vrot.slane %v214, %v222
    %v224 = vlaneseq
    %v225 = vshrl.u32 %v224, 7
    %v226 = vsub.s32 2, %v225
    %v227 = vrot.slane %v214, %v226
    %v228 = vlaneseq
    %v229 = vshrl.u32 %v228, 7
    %v230 = vsub.s32 3, %v229
    %v231 = vrot.slane %v214, %v230
    %v268 = vunpack.c.l.b16 %v182
    %v269 = vunpack.c.h.b16 %v182
    %v270 = vunpack.c.l.b16 %v183
    %v271 = vunpack.c.h.b16 %v183
    %v272 = vunpack.c.l.b16 %v184
    %v273 = vunpack.c.h.b16 %v184
    %v274 = vunpack.c.l.b16 %v185
    %v275 = vunpack.c.h.b16 %v185
    %v276 = vunpack.c.l.b16 %v186
    %v277 = vunpack.c.h.b16 %v186
    %v278 = vunpack.c.l.b16 %v187
    %v279 = vunpack.c.h.b16 %v187
    %v280 = vunpack.c.l.b16 %v188
    %v281 = vunpack.c.h.b16 %v188
    %v282 = vunpack.c.l.b16 %v189
    %v283 = vunpack.c.h.b16 %v189
    %v284 = vunpack.c.l.b16 %v190
    %v285 = vunpack.c.h.b16 %v190
    %v286 = vunpack.c.l.b16 %v191
    %v287 = vunpack.c.h.b16 %v191
    %v288 = vunpack.c.l.b16 %v192
    %v289 = vunpack.c.h.b16 %v192
    %v290 = vunpack.c.l.b16 %v193
    %v291 = vunpack.c.h.b16 %v193
    %v292 = vunpack.c.l.b16 %v194
    %v293 = vunpack.c.h.b16 %v194
    %v294 = vunpack.c.l.b16 %v195
    %v295 = vunpack.c.h.b16 %v195
    %v296 = vunpack.c.l.b16 %v196
    %v297 = vunpack.c.h.b16 %v196
    %v298 = vunpack.c.l.b16 %v197
    %v299 = vunpack.c.h.b16 %v197
    %v300 = vunpack.c.l.b16 %v198
    %v301 = vunpack.c.h.b16 %v198
    %v302 = vunpack.c.l.b16 %v199
    %v303 = vunpack.c.h.b16 %v199
    %v304 = vunpack.c.l.b16 %v200
    %v305 = vunpack.c.h.b16 %v200
    %v306 = vunpack.c.l.b16 %v201
    %v307 = vunpack.c.h.b16 %v201
    %v308 = vunpack.c.l.b16 %v202
    %v309 = vunpack.c.h.b16 %v202
    %v310 = vunpack.c.l.b16 %v203
    %v311 = vunpack.c.h.b16 %v203
    %v312 = vunpack.c.l.b16 %v204
    %v313 = vunpack.c.h.b16 %v204
    %v314 = vunpack.c.l.b16 %v205
    %v315 = vunpack.c.h.b16 %v205
    %v316 = vunpack.c.l.b16 %v206
    %v317 = vunpack.c.h.b16 %v206
    %v318 = vunpack.c.l.b16 %v207
    %v319 = vunpack.c.h.b16 %v207
    %v320 = vunpack.c.l.b16 %v208
    %v321 = vunpack.c.h.b16 %v208
    %v322 = vunpack.c.l.b16 %v209
    %v323 = vunpack.c.h.b16 %v209
    %v324 = vunpack.c.l.b16 %v210
    %v325 = vunpack.c.h.b16 %v210
    %v326 = vunpack.c.l.b16 %v211
    %v327 = vunpack.c.h.b16 %v211
    %v328 = vunpack.c.l.b16 %v212
    %v329 = vunpack.c.h.b16 %v212
    %v330 = vunpack.c.l.b16 %v213
    %v331 = vunpack.c.h.b16 %v213
    %v332 = vpack.c.b16 %v272, %v268
    %v333 = vpack.c.b16 %v273, %v269
    %v334 = vpack.c.b16 %v274, %v270
    %v335 = vpack.c.b16 %v275, %v271
    %v336 = vpack.c.b16 %v280, %v276
    %v337 = vpack.c.b16 %v281, %v277
    %v338 = vpack.c.b16 %v282, %v278
    %v339 = vpack.c.b16 %v283, %v279
    %v340 = vpack.c.b16 %v288, %v284
    %v341 = vpack.c.b16 %v289, %v285
    %v342 = vpack.c.b16 %v290, %v286
    %v343 = vpack.c.b16 %v291, %v287
    %v344 = vpack.c.b16 %v296, %v292
    %v345 = vpack.c.b16 %v297, %v293
    %v346 = vpack.c.b16 %v298, %v294
    %v347 = vpack.c.b16 %v299, %v295
    %v348 = vpack.c.b16 %v304, %v300
    %v349 = vpack.c.b16 %v305, %v301
    %v350 = vpack.c.b16 %v306, %v302
    %v351 = vpack.c.b16 %v307, %v303
    %v352 = vpack.c.b16 %v312, %v308
    %v353 = vpack.c.b16 %v313, %v309
    %v354 = vpack.c.b16 %v314, %v310
    %v355 = vpack.c.b16 %v315, %v311
    %v356 = vpack.c.b16 %v320, %v316
    %v357 = vpack.c.b16 %v321, %v317
    %v358 = vpack.c.b16 %v322, %v318
    %v359 = vpack.c.b16 %v323, %v319
    %v360 = vpack.c.b16 %v328, %v324
    %v361 = vpack.c.b16 %v329, %v325
    %v362 = vpack.c.b16 %v330, %v326
    %v363 = vpack.c.b16 %v331, %v327
    %396 = vmatprep.subr.bf16.mxu0 %v333
    %397 = vmatpush1.bf16.msra.mxu0 %v332
    %398 = vmatprep.subr.bf16.mxu0 %v337
    %399 = vmatpush1.bf16.msra.mxu0 %v336
    %400 = vmatprep.subr.bf16.mxu0 %v341
    %401 = vmatpush1.bf16.msra.mxu0 %v340
    %402 = vmatprep.subr.bf16.mxu0 %v345
    %403 = vmatpush1.bf16.msra.mxu0 %v344
    %404 = vmatprep.subr.bf16.mxu0 %v349
    %405 = vmatpush1.bf16.msra.mxu0 %v348
    %406 = vmatprep.subr.bf16.mxu0 %v353
    %407 = vmatpush1.bf16.msra.mxu0 %v352
    %408 = vmatprep.subr.bf16.mxu0 %v357
    %409 = vmatpush1.bf16.msra.mxu0 %v356
    %410 = vmatprep.subr.bf16.mxu0 %v361
    %411 = vmatpush1.bf16.msra.mxu0 %v360
    %412 = vmatprep.subr.bf16.mxu0 0
    %413 = vmatpush1.bf16.msra.mxu0 0
    %414 = vmatprep.subr.bf16.mxu0 0
    %415 = vmatpush1.bf16.msra.mxu0 0
    %416 = vmatprep.subr.bf16.mxu0 0
    %417 = vmatpush1.bf16.msra.mxu0 0
    %418 = vmatprep.subr.bf16.mxu0 0
    %419 = vmatpush1.bf16.msra.mxu0 0
    %420 = vmatprep.subr.bf16.mxu0 0
    %421 = vmatpush1.bf16.msra.mxu0 0
    %422 = vmatprep.subr.bf16.mxu0 0
    %423 = vmatpush1.bf16.msra.mxu0 0
    %424 = vmatprep.subr.bf16.mxu0 0
    %425 = vmatpush1.bf16.msra.mxu0 0
    %426 = vmatprep.subr.bf16.mxu0 0
    %427 = vmatpush1.bf16.msra.mxu0 0
    %428 = vmatprep.mubr.bf16.mxu0 0
    %429 = vmatmul.mubr.bf16.gmra.mrb[0].mxu0 %v181
    %v430 = vpop.f32.mrb[0].mxu0
    %v431 = vadd.f32 %v219, %v430
    %v432 = vpop.f32.mrb[0].mxu0
    %v433 = vadd.f32 %v223, %v432
    %v434 = vpop.f32.mrb[0].mxu0
    %v435 = vpop.f32.mrb[0].mxu0
    %436 = vdwg.mxu0
    %437 = vmatprep.subr.bf16.mxu0 %v335
    %438 = vmatpush1.bf16.msra.mxu0 %v334
    %439 = vmatprep.subr.bf16.mxu0 %v339
    %440 = vmatpush1.bf16.msra.mxu0 %v338
    %441 = vmatprep.subr.bf16.mxu0 %v343
    %442 = vmatpush1.bf16.msra.mxu0 %v342
    %443 = vmatprep.subr.bf16.mxu0 %v347
    %444 = vmatpush1.bf16.msra.mxu0 %v346
    %445 = vmatprep.subr.bf16.mxu0 %v351
    %446 = vmatpush1.bf16.msra.mxu0 %v350
    %447 = vmatprep.subr.bf16.mxu0 %v355
    %448 = vmatpush1.bf16.msra.mxu0 %v354
    %449 = vmatprep.subr.bf16.mxu0 %v359
    %450 = vmatpush1.bf16.msra.mxu0 %v358
    %451 = vmatprep.subr.bf16.mxu0 %v363
    %452 = vmatpush1.bf16.msra.mxu0 %v362
    %453 = vmatprep.subr.bf16.mxu0 0
    %454 = vmatpush1.bf16.msra.mxu0 0
    %455 = vmatprep.subr.bf16.mxu0 0
    %456 = vmatpush1.bf16.msra.mxu0 0
    %457 = vmatprep.subr.bf16.mxu0 0
    %458 = vmatpush1.bf16.msra.mxu0 0
    %459 = vmatprep.subr.bf16.mxu0 0
    %460 = vmatpush1.bf16.msra.mxu0 0
    %461 = vmatprep.subr.bf16.mxu0 0
    %462 = vmatpush1.bf16.msra.mxu0 0
    %463 = vmatprep.subr.bf16.mxu0 0
    %464 = vmatpush1.bf16.msra.mxu0 0
    %465 = vmatprep.subr.bf16.mxu0 0
    %466 = vmatpush1.bf16.msra.mxu0 0
    %467 = vmatprep.subr.bf16.mxu0 0
    %468 = vmatpush1.bf16.msra.mxu0 0
    %469 = vmatprep.mubr.bf16.mxu0 0
    %470 = vmatmul.mubr.bf16.gmra.mrb[0].mxu0 %v181
    %v471 = vpop.f32.mrb[0].mxu0
    %v472 = vadd.f32 %v227, %v471
    %v473 = vpop.f32.mrb[0].mxu0
    %v474 = vadd.f32 %v231, %v473
    %v475 = vpop.f32.mrb[0].mxu0
    %v476 = vpop.f32.mrb[0].mxu0
    %477 = vdwg.mxu0
    %v478 = vmax.f32 %v431, 0.0
    %v479 = vmax.f32 %v433, 0.0
    %v480 = vmax.f32 %v472, 0.0
    %v481 = vmax.f32 %v474, 0.0
    %v482 = vpack.c.bf16 %v478, %v478
    %v483 = vpack.c.bf16 %v479, %v479
    %v484 = vpack.c.bf16 %v480, %v480
    %v485 = vpack.c.bf16 %v481, %v481
    %v486 = vld [vmem:[%s7] sm:$0xff]
    %v487 = vld [vmem:[%s7 + $0x8] sm:$0xff]
    %v488 = vld [vmem:[%s7 + $0x10] sm:$0xff]
    %v489 = vld [vmem:[%s7 + $0x18] sm:$0xf]
    %v490 = vld [vmem:[%s7 + $0x1c] sm:$0xff]
    %v491 = vld [vmem:[%s7 + $0x24] sm:$0xff]
    %v492 = vld [vmem:[%s7 + $0x2c] sm:$0xff]
    %v493 = vld [vmem:[%s7 + $0x34] sm:$0xf]
    %v494 = vld [vmem:[%s7 + $0x38] sm:$0xff]
    %v495 = vld [vmem:[%s7 + $0x40] sm:$0xff]
    %v496 = vld [vmem:[%s7 + $0x48] sm:$0xff]
    %v497 = vld [vmem:[%s7 + $0x50] sm:$0xf]
    %v498 = vld [vmem:[%s7 + $0x54] sm:$0xff]
    %v499 = vld [vmem:[%s7 + $0x5c] sm:$0xff]
    %v500 = vld [vmem:[%s7 + $0x64] sm:$0xff]
    %v501 = vld [vmem:[%s7 + $0x6c] sm:$0xf]
    %v502 = vld [vmem:[%s7 + $0x70] sm:$0xff]
    %v503 = vld [vmem:[%s7 + $0x78] sm:$0xff]
    %v504 = vld [vmem:[%s7 + $0x80] sm:$0xff]
    %v505 = vld [vmem:[%s7 + $0x88] sm:$0xf]
    %v506 = vld [vmem:[%s7 + $0x8c] sm:$0xff]
    %v507 = vld [vmem:[%s7 + $0x94] sm:$0xff]
    %v508 = vld [vmem:[%s7 + $0x9c] sm:$0xff]
    %v509 = vld [vmem:[%s7 + $0xa4] sm:$0xf]
    %v510 = vld [vmem:[%s7 + $0xa8] sm:$0xff]
    %v511 = vld [vmem:[%s7 + $0xb0] sm:$0xff]
    %v512 = vld [vmem:[%s7 + $0xb8] sm:$0xff]
    %v513 = vld [vmem:[%s7 + $0xc0] sm:$0xf]
    %v514 = vld [vmem:[%s7 + $0xc4] sm:$0xff]
    %v515 = vld [vmem:[%s7 + $0xcc] sm:$0xff]
    %v516 = vld [vmem:[%s7 + $0xd4] sm:$0xff]
    %v517 = vld [vmem:[%s7 + $0xdc] sm:$0xf]
    %v518 = vld [vmem:[%s7 + $0xe0] sm:$0xff]
    %v519 = vld [vmem:[%s7 + $0xe8] sm:$0xff]
    %v520 = vld [vmem:[%s7 + $0xf0] sm:$0xff]
    %v521 = vld [vmem:[%s7 + $0xf8] sm:$0xf]
    %v522 = vld [vmem:[%s7 + $0xfc] sm:$0xff]
    %v523 = vld [vmem:[%s7 + $0x104] sm:$0xff]
    %v524 = vld [vmem:[%s7 + $0x10c] sm:$0xff]
    %v525 = vld [vmem:[%s7 + $0x114] sm:$0xf]
    %v526 = vld [vmem:[%s7 + $0x118] sm:$0xff]
    %v527 = vld [vmem:[%s7 + $0x120] sm:$0xff]
    %v528 = vld [vmem:[%s7 + $0x128] sm:$0xff]
    %v529 = vld [vmem:[%s7 + $0x130] sm:$0xf]
    %v530 = vld [vmem:[%s7 + $0x134] sm:$0xff]
    %v531 = vld [vmem:[%s7 + $0x13c] sm:$0xff]
    %v532 = vld [vmem:[%s7 + $0x144] sm:$0xff]
    %v533 = vld [vmem:[%s7 + $0x14c] sm:$0xf]
    %v534 = vld [vmem:[%s7 + $0x150] sm:$0xff]
    %v535 = vld [vmem:[%s7 + $0x158] sm:$0xff]
    %v536 = vld [vmem:[%s7 + $0x160] sm:$0xff]
    %v537 = vld [vmem:[%s7 + $0x168] sm:$0xf]
    %v538 = vld [vmem:[%s7 + $0x16c] sm:$0xff]
    %v539 = vld [vmem:[%s7 + $0x174] sm:$0xff]
    %v540 = vld [vmem:[%s7 + $0x17c] sm:$0xff]
    %v541 = vld [vmem:[%s7 + $0x184] sm:$0xf]
    %v542 = vld [vmem:[%s7 + $0x188] sm:$0xff]
    %v543 = vld [vmem:[%s7 + $0x190] sm:$0xff]
    %v544 = vld [vmem:[%s7 + $0x198] sm:$0xff]
    %v545 = vld [vmem:[%s7 + $0x1a0] sm:$0xf]
    %v546 = vld [vmem:[%s7 + $0x1a4] sm:$0xff]
    %v547 = vld [vmem:[%s7 + $0x1ac] sm:$0xff]
    %v548 = vld [vmem:[%s7 + $0x1b4] sm:$0xff]
    %v549 = vld [vmem:[%s7 + $0x1bc] sm:$0xf]
    %v550 = vld [vmem:[%s7 + $0x1c0] sm:$0xff]
    %v551 = vld [vmem:[%s7 + $0x1c8] sm:$0xff]
    %v552 = vld [vmem:[%s7 + $0x1d0] sm:$0xff]
    %v553 = vld [vmem:[%s7 + $0x1d8] sm:$0xf]
    %v554 = vld [vmem:[%s7 + $0x1dc] sm:$0xff]
    %v555 = vld [vmem:[%s7 + $0x1e4] sm:$0xff]
    %v556 = vld [vmem:[%s7 + $0x1ec] sm:$0xff]
    %v557 = vld [vmem:[%s7 + $0x1f4] sm:$0xf]
    %v558 = vld [vmem:[%s7 + $0x1f8] sm:$0xff]
    %v559 = vld [vmem:[%s7 + $0x200] sm:$0xff]
    %v560 = vld [vmem:[%s7 + $0x208] sm:$0xff]
    %v561 = vld [vmem:[%s7 + $0x210] sm:$0xf]
    %v562 = vld [vmem:[%s7 + $0x214] sm:$0xff]
    %v563 = vld [vmem:[%s7 + $0x21c] sm:$0xff]
    %v564 = vld [vmem:[%s7 + $0x224] sm:$0xff]
    %v565 = vld [vmem:[%s7 + $0x22c] sm:$0xf]
    %v566 = vld [vmem:[%s7 + $0x230] sm:$0xff]
    %v567 = vld [vmem:[%s7 + $0x238] sm:$0xff]
    %v568 = vld [vmem:[%s7 + $0x240] sm:$0xff]
    %v569 = vld [vmem:[%s7 + $0x248] sm:$0xf]
    %v570 = vld [vmem:[%s7 + $0x24c] sm:$0xff]
    %v571 = vld [vmem:[%s7 + $0x254] sm:$0xff]
    %v572 = vld [vmem:[%s7 + $0x25c] sm:$0xff]
    %v573 = vld [vmem:[%s7 + $0x264] sm:$0xf]
    %v574 = vld [vmem:[%s7 + $0x268] sm:$0xff]
    %v575 = vld [vmem:[%s7 + $0x270] sm:$0xff]
    %v576 = vld [vmem:[%s7 + $0x278] sm:$0xff]
    %v577 = vld [vmem:[%s7 + $0x280] sm:$0xf]
    %v578 = vld [vmem:[%s7 + $0x284] sm:$0xff]
    %v579 = vld [vmem:[%s7 + $0x28c] sm:$0xff]
    %v580 = vld [vmem:[%s7 + $0x294] sm:$0xff]
    %v581 = vld [vmem:[%s7 + $0x29c] sm:$0xf]
    %v582 = vld [vmem:[%s7 + $0x2a0] sm:$0xff]
    %v583 = vld [vmem:[%s7 + $0x2a8] sm:$0xff]
    %v584 = vld [vmem:[%s7 + $0x2b0] sm:$0xff]
    %v585 = vld [vmem:[%s7 + $0x2b8] sm:$0xf]
    %v586 = vld [vmem:[%s7 + $0x2bc] sm:$0xff]
    %v587 = vld [vmem:[%s7 + $0x2c4] sm:$0xff]
    %v588 = vld [vmem:[%s7 + $0x2cc] sm:$0xff]
    %v589 = vld [vmem:[%s7 + $0x2d4] sm:$0xf]
    %v590 = vld [vmem:[%s7 + $0x2d8] sm:$0xff]
    %v591 = vld [vmem:[%s7 + $0x2e0] sm:$0xff]
    %v592 = vld [vmem:[%s7 + $0x2e8] sm:$0xff]
    %v593 = vld [vmem:[%s7 + $0x2f0] sm:$0xf]
    %v594 = vld [vmem:[%s7 + $0x2f4] sm:$0xff]
    %v595 = vld [vmem:[%s7 + $0x2fc] sm:$0xff]
    %v596 = vld [vmem:[%s7 + $0x304] sm:$0xff]
    %v597 = vld [vmem:[%s7 + $0x30c] sm:$0xf]
    %v598 = vld [vmem:[%s7 + $0x310] sm:$0xff]
    %v599 = vld [vmem:[%s7 + $0x318] sm:$0xff]
    %v600 = vld [vmem:[%s7 + $0x320] sm:$0xff]
    %v601 = vld [vmem:[%s7 + $0x328] sm:$0xf]
    %v602 = vld [vmem:[%s7 + $0x32c] sm:$0xff]
    %v603 = vld [vmem:[%s7 + $0x334] sm:$0xff]
    %v604 = vld [vmem:[%s7 + $0x33c] sm:$0xff]
    %v605 = vld [vmem:[%s7 + $0x344] sm:$0xf]
    %v606 = vld [vmem:[%s7 + $0x348] sm:$0xff]
    %v607 = vld [vmem:[%s7 + $0x350] sm:$0xff]
    %v608 = vld [vmem:[%s7 + $0x358] sm:$0xff]
    %v609 = vld [vmem:[%s7 + $0x360] sm:$0xf]
    %v610 = vld [vmem:[%s7 + $0x364] sm:$0xff]
    %v611 = vld [vmem:[%s7 + $0x36c] sm:$0xff]
    %v612 = vld [vmem:[%s7 + $0x374] sm:$0xff]
    %v613 = vld [vmem:[%s7 + $0x37c] sm:$0xf]
    %v614 = vld [vmem:[%s7 + $0x380] sm:$0xff]
    %v615 = vld [vmem:[%s7 + $0x388] sm:$0xff]
    %v616 = vld [vmem:[%s7 + $0x390] sm:$0xff]
    %v617 = vld [vmem:[%s7 + $0x398] sm:$0xf]
    %v618 = vld [vmem:[%s7 + $0x39c] sm:$0xff]
    %v619 = vld [vmem:[%s7 + $0x3a4] sm:$0xff]
    %v620 = vld [vmem:[%s7 + $0x3ac] sm:$0xff]
    %v621 = vld [vmem:[%s7 + $0x3b4] sm:$0xf]
    %v622 = vld [vmem:[%s7 + $0x3b8] sm:$0xff]
    %v623 = vld [vmem:[%s7 + $0x3c0] sm:$0xff]
    %v624 = vld [vmem:[%s7 + $0x3c8] sm:$0xff]
    %v625 = vld [vmem:[%s7 + $0x3d0] sm:$0xf]
    %v626 = vld [vmem:[%s7 + $0x3d4] sm:$0xff]
    %v627 = vld [vmem:[%s7 + $0x3dc] sm:$0xff]
    %v628 = vld [vmem:[%s7 + $0x3e4] sm:$0xff]
    %v629 = vld [vmem:[%s7 + $0x3ec] sm:$0xf]
    %v630 = vld [vmem:[%s7 + $0x3f0] sm:$0xff]
    %v631 = vld [vmem:[%s7 + $0x3f8] sm:$0xff]
    %v632 = vld [vmem:[%s7 + $0x400] sm:$0xff]
    %v633 = vld [vmem:[%s7 + $0x408] sm:$0xf]
    %v634 = vld [vmem:[%s7 + $0x40c] sm:$0xff]
    %v635 = vld [vmem:[%s7 + $0x414] sm:$0xff]
    %v636 = vld [vmem:[%s7 + $0x41c] sm:$0xff]
    %v637 = vld [vmem:[%s7 + $0x424] sm:$0xf]
    %v638 = vld [vmem:[%s7 + $0x428] sm:$0xff]
    %v639 = vld [vmem:[%s7 + $0x430] sm:$0xff]
    %v640 = vld [vmem:[%s7 + $0x438] sm:$0xff]
    %v641 = vld [vmem:[%s7 + $0x440] sm:$0xf]
    %v642 = vld [vmem:[%s7 + $0x444] sm:$0xff]
    %v643 = vld [vmem:[%s7 + $0x44c] sm:$0xff]
    %v644 = vld [vmem:[%s7 + $0x454] sm:$0xff]
    %v645 = vld [vmem:[%s7 + $0x45c] sm:$0xf]
    %v646 = vld [vmem:[%s7 + $0x460] sm:$0xff]
    %v647 = vld [vmem:[%s7 + $0x468] sm:$0xff]
    %v648 = vld [vmem:[%s7 + $0x470] sm:$0xff]
    %v649 = vld [vmem:[%s7 + $0x478] sm:$0xf]
    %v650 = vld [vmem:[%s7 + $0x47c] sm:$0xff]
    %v651 = vld [vmem:[%s7 + $0x484] sm:$0xff]
    %v652 = vld [vmem:[%s7 + $0x48c] sm:$0xff]
    %v653 = vld [vmem:[%s7 + $0x494] sm:$0xf]
    %v654 = vld [vmem:[%s7 + $0x498] sm:$0xff]
    %v655 = vld [vmem:[%s7 + $0x4a0] sm:$0xff]
    %v656 = vld [vmem:[%s7 + $0x4a8] sm:$0xff]
    %v657 = vld [vmem:[%s7 + $0x4b0] sm:$0xf]
    %v658 = vld [vmem:[%s7 + $0x4b4] sm:$0xff]
    %v659 = vld [vmem:[%s7 + $0x4bc] sm:$0xff]
    %v660 = vld [vmem:[%s7 + $0x4c4] sm:$0xff]
    %v661 = vld [vmem:[%s7 + $0x4cc] sm:$0xf]
    %v662 = vld [vmem:[%s7 + $0x4d0] sm:$0xff]
    %v663 = vld [vmem:[%s7 + $0x4d8] sm:$0xff]
    %v664 = vld [vmem:[%s7 + $0x4e0] sm:$0xff]
    %v665 = vld [vmem:[%s7 + $0x4e8] sm:$0xf]
    %v666 = vld [vmem:[%s7 + $0x4ec] sm:$0xff]
    %v667 = vld [vmem:[%s7 + $0x4f4] sm:$0xff]
    %v668 = vld [vmem:[%s7 + $0x4fc] sm:$0xff]
    %v669 = vld [vmem:[%s7 + $0x504] sm:$0xf]
    %v670 = vld [vmem:[%s7 + $0x508] sm:$0xff]
    %v671 = vld [vmem:[%s7 + $0x510] sm:$0xff]
    %v672 = vld [vmem:[%s7 + $0x518] sm:$0xff]
    %v673 = vld [vmem:[%s7 + $0x520] sm:$0xf]
    %v674 = vld [vmem:[%s7 + $0x524] sm:$0xff]
    %v675 = vld [vmem:[%s7 + $0x52c] sm:$0xff]
    %v676 = vld [vmem:[%s7 + $0x534] sm:$0xff]
    %v677 = vld [vmem:[%s7 + $0x53c] sm:$0xf]
    %v678 = vld [vmem:[%s7 + $0x540] sm:$0xff]
    %v679 = vld [vmem:[%s7 + $0x548] sm:$0xff]
    %v680 = vld [vmem:[%s7 + $0x550] sm:$0xff]
    %v681 = vld [vmem:[%s7 + $0x558] sm:$0xf]
    %v682 = vld [vmem:[%s7 + $0x55c] sm:$0xff]
    %v683 = vld [vmem:[%s7 + $0x564] sm:$0xff]
    %v684 = vld [vmem:[%s7 + $0x56c] sm:$0xff]
    %v685 = vld [vmem:[%s7 + $0x574] sm:$0xf]
    %v686 = vld [vmem:[%s7 + $0x578] sm:$0xff]
    %v687 = vld [vmem:[%s7 + $0x580] sm:$0xff]
    %v688 = vld [vmem:[%s7 + $0x588] sm:$0xff]
    %v689 = vld [vmem:[%s7 + $0x590] sm:$0xf]
    %v690 = vld [vmem:[%s7 + $0x594] sm:$0xff]
    %v691 = vld [vmem:[%s7 + $0x59c] sm:$0xff]
    %v692 = vld [vmem:[%s7 + $0x5a4] sm:$0xff]
    %v693 = vld [vmem:[%s7 + $0x5ac] sm:$0xf]
    %v694 = vld [vmem:[%s7 + $0x5b0] sm:$0xff]
    %v695 = vld [vmem:[%s7 + $0x5b8] sm:$0xff]
    %v696 = vld [vmem:[%s7 + $0x5c0] sm:$0xff]
    %v697 = vld [vmem:[%s7 + $0x5c8] sm:$0xf]
    %v698 = vld [vmem:[%s7 + $0x5cc] sm:$0xff]
    %v699 = vld [vmem:[%s7 + $0x5d4] sm:$0xff]
    %v700 = vld [vmem:[%s7 + $0x5dc] sm:$0xff]
    %v701 = vld [vmem:[%s7 + $0x5e4] sm:$0xf]
    %v702 = vld [vmem:[%s7 + $0x5e8] sm:$0xff]
    %v703 = vld [vmem:[%s7 + $0x5f0] sm:$0xff]
    %v704 = vld [vmem:[%s7 + $0x5f8] sm:$0xff]
    %v705 = vld [vmem:[%s7 + $0x600] sm:$0xf]
    %v706 = vld [vmem:[%s7 + $0x604] sm:$0xff]
    %v707 = vld [vmem:[%s7 + $0x60c] sm:$0xff]
    %v708 = vld [vmem:[%s7 + $0x614] sm:$0xff]
    %v709 = vld [vmem:[%s7 + $0x61c] sm:$0xf]
    %v710 = vld [vmem:[%s7 + $0x620] sm:$0xff]
    %v711 = vld [vmem:[%s7 + $0x628] sm:$0xff]
    %v712 = vld [vmem:[%s7 + $0x630] sm:$0xff]
    %v713 = vld [vmem:[%s7 + $0x638] sm:$0xf]
    %v714 = vld [vmem:[%s7 + $0x63c] sm:$0xff]
    %v715 = vld [vmem:[%s7 + $0x644] sm:$0xff]
    %v716 = vld [vmem:[%s7 + $0x64c] sm:$0xff]
    %v717 = vld [vmem:[%s7 + $0x654] sm:$0xf]
    %v718 = vld [vmem:[%s7 + $0x658] sm:$0xff]
    %v719 = vld [vmem:[%s7 + $0x660] sm:$0xff]
    %v720 = vld [vmem:[%s7 + $0x668] sm:$0xff]
    %v721 = vld [vmem:[%s7 + $0x670] sm:$0xf]
    %v722 = vld [vmem:[%s7 + $0x674] sm:$0xff]
    %v723 = vld [vmem:[%s7 + $0x67c] sm:$0xff]
    %v724 = vld [vmem:[%s7 + $0x684] sm:$0xff]
    %v725 = vld [vmem:[%s7 + $0x68c] sm:$0xf]
    %v726 = vld [vmem:[%s7 + $0x690] sm:$0xff]
    %v727 = vld [vmem:[%s7 + $0x698] sm:$0xff]
    %v728 = vld [vmem:[%s7 + $0x6a0] sm:$0xff]
    %v729 = vld [vmem:[%s7 + $0x6a8] sm:$0xf]
    %v730 = vld [vmem:[%s7 + $0x6ac] sm:$0xff]
    %v731 = vld [vmem:[%s7 + $0x6b4] sm:$0xff]
    %v732 = vld [vmem:[%s7 + $0x6bc] sm:$0xff]
    %v733 = vld [vmem:[%s7 + $0x6c4] sm:$0xf]
    %v734 = vld [vmem:[%s7 + $0x6c8] sm:$0xff]
    %v735 = vld [vmem:[%s7 + $0x6d0] sm:$0xff]
    %v736 = vld [vmem:[%s7 + $0x6d8] sm:$0xff]
    %v737 = vld [vmem:[%s7 + $0x6e0] sm:$0xf]
    %v738 = vld [vmem:[%s7 + $0x6e4] sm:$0xff]
    %v739 = vld [vmem:[%s7 + $0x6ec] sm:$0xff]
    %v740 = vld [vmem:[%s7 + $0x6f4] sm:$0xff]
    %v741 = vld [vmem:[%s7 + $0x6fc] sm:$0xf]
    %v742 = vld [vmem:[%s8] sm:$0xff]
    %v744 = vlaneseq
    %v745 = vshrl.u32 %v744, 7
    %v746 = vsub.s32 0, %v745
    %v747 = vrot.slane %v742, %v746
    %v748 = vlaneseq
    %v749 = vshrl.u32 %v748, 7
    %v750 = vsub.s32 1, %v749
    %v751 = vrot.slane %v742, %v750
    %v752 = vlaneseq
    %v753 = vshrl.u32 %v752, 7
    %v754 = vsub.s32 2, %v753
    %v755 = vrot.slane %v742, %v754
    %v756 = vlaneseq
    %v757 = vshrl.u32 %v756, 7
    %v758 = vsub.s32 3, %v757
    %v759 = vrot.slane %v742, %v758
    %v760 = vlaneseq
    %v761 = vshrl.u32 %v760, 7
    %v762 = vsub.s32 4, %v761
    %v763 = vrot.slane %v742, %v762
    %v764 = vlaneseq
    %v765 = vshrl.u32 %v764, 7
    %v766 = vsub.s32 5, %v765
    %v767 = vrot.slane %v742, %v766
    %v768 = vlaneseq
    %v769 = vshrl.u32 %v768, 7
    %v770 = vsub.s32 6, %v769
    %v771 = vrot.slane %v742, %v770
    %v1035 = vunpack.c.l.b16 %v486
    %v1036 = vunpack.c.h.b16 %v486
    %v1037 = vunpack.c.l.b16 %v487
    %v1038 = vunpack.c.h.b16 %v487
    %v1039 = vunpack.c.l.b16 %v488
    %v1040 = vunpack.c.h.b16 %v488
    %v1041 = vunpack.c.l.b16 %v489
    %v1042 = vunpack.c.l.b16 %v490
    %v1043 = vunpack.c.h.b16 %v490
    %v1044 = vunpack.c.l.b16 %v491
    %v1045 = vunpack.c.h.b16 %v491
    %v1046 = vunpack.c.l.b16 %v492
    %v1047 = vunpack.c.h.b16 %v492
    %v1048 = vunpack.c.l.b16 %v493
    %v1049 = vunpack.c.l.b16 %v494
    %v1050 = vunpack.c.h.b16 %v494
    %v1051 = vunpack.c.l.b16 %v495
    %v1052 = vunpack.c.h.b16 %v495
    %v1053 = vunpack.c.l.b16 %v496
    %v1054 = vunpack.c.h.b16 %v496
    %v1055 = vunpack.c.l.b16 %v497
    %v1056 = vunpack.c.l.b16 %v498
    %v1057 = vunpack.c.h.b16 %v498
    %v1058 = vunpack.c.l.b16 %v499
    %v1059 = vunpack.c.h.b16 %v499
    %v1060 = vunpack.c.l.b16 %v500
    %v1061 = vunpack.c.h.b16 %v500
    %v1062 = vunpack.c.l.b16 %v501
    %v1063 = vunpack.c.l.b16 %v502
    %v1064 = vunpack.c.h.b16 %v502
    %v1065 = vunpack.c.l.b16 %v503
    %v1066 = vunpack.c.h.b16 %v503
    %v1067 = vunpack.c.l.b16 %v504
    %v1068 = vunpack.c.h.b16 %v504
    %v1069 = vunpack.c.l.b16 %v505
    %v1070 = vunpack.c.l.b16 %v506
    %v1071 = vunpack.c.h.b16 %v506
    %v1072 = vunpack.c.l.b16 %v507
    %v1073 = vunpack.c.h.b16 %v507
    %v1074 = vunpack.c.l.b16 %v508
    %v1075 = vunpack.c.h.b16 %v508
    %v1076 = vunpack.c.l.b16 %v509
    %v1077 = vunpack.c.l.b16 %v510
    %v1078 = vunpack.c.h.b16 %v510
    %v1079 = vunpack.c.l.b16 %v511
    %v1080 = vunpack.c.h.b16 %v511
    %v1081 = vunpack.c.l.b16 %v512
    %v1082 = vunpack.c.h.b16 %v512
    %v1083 = vunpack.c.l.b16 %v513
    %v1084 = vunpack.c.l.b16 %v514
    %v1085 = vunpack.c.h.b16 %v514
    %v1086 = vunpack.c.l.b16 %v515
    %v1087 = vunpack.c.h.b16 %v515
    %v1088 = vunpack.c.l.b16 %v516
    %v1089 = vunpack.c.h.b16 %v516
    %v1090 = vunpack.c.l.b16 %v517
    %v1091 = vunpack.c.l.b16 %v518
    %v1092 = vunpack.c.h.b16 %v518
    %v1093 = vunpack.c.l.b16 %v519
    %v1094 = vunpack.c.h.b16 %v519
    %v1095 = vunpack.c.l.b16 %v520
    %v1096 = vunpack.c.h.b16 %v520
    %v1097 = vunpack.c.l.b16 %v521
    %v1098 = vunpack.c.l.b16 %v522
    %v1099 = vunpack.c.h.b16 %v522
    %v1100 = vunpack.c.l.b16 %v523
    %v1101 = vunpack.c.h.b16 %v523
    %v1102 = vunpack.c.l.b16 %v524
    %v1103 = vunpack.c.h.b16 %v524
    %v1104 = vunpack.c.l.b16 %v525
    %v1105 = vunpack.c.l.b16 %v526
    %v1106 = vunpack.c.h.b16 %v526
    %v1107 = vunpack.c.l.b16 %v527
    %v1108 = vunpack.c.h.b16 %v527
    %v1109 = vunpack.c.l.b16 %v528
    %v1110 = vunpack.c.h.b16 %v528
    %v1111 = vunpack.c.l.b16 %v529
    %v1112 = vunpack.c.l.b16 %v530
    %v1113 = vunpack.c.h.b16 %v530
    %v1114 = vunpack.c.l.b16 %v531
    %v1115 = vunpack.c.h.b16 %v531
    %v1116 = vunpack.c.l.b16 %v532
    %v1117 = vunpack.c.h.b16 %v532
    %v1118 = vunpack.c.l.b16 %v533
    %v1119 = vunpack.c.l.b16 %v534
    %v1120 = vunpack.c.h.b16 %v534
    %v1121 = vunpack.c.l.b16 %v535
    %v1122 = vunpack.c.h.b16 %v535
    %v1123 = vunpack.c.l.b16 %v536
    %v1124 = vunpack.c.h.b16 %v536
    %v1125 = vunpack.c.l.b16 %v537
    %v1126 = vunpack.c.l.b16 %v538
    %v1127 = vunpack.c.h.b16 %v538
    %v1128 = vunpack.c.l.b16 %v539
    %v1129 = vunpack.c.h.b16 %v539
    %v1130 = vunpack.c.l.b16 %v540
    %v1131 = vunpack.c.h.b16 %v540
    %v1132 = vunpack.c.l.b16 %v541
    %v1133 = vunpack.c.l.b16 %v542
    %v1134 = vunpack.c.h.b16 %v542
    %v1135 = vunpack.c.l.b16 %v543
    %v1136 = vunpack.c.h.b16 %v543
    %v1137 = vunpack.c.l.b16 %v544
    %v1138 = vunpack.c.h.b16 %v544
    %v1139 = vunpack.c.l.b16 %v545
    %v1140 = vunpack.c.l.b16 %v546
    %v1141 = vunpack.c.h.b16 %v546
    %v1142 = vunpack.c.l.b16 %v547
    %v1143 = vunpack.c.h.b16 %v547
    %v1144 = vunpack.c.l.b16 %v548
    %v1145 = vunpack.c.h.b16 %v548
    %v1146 = vunpack.c.l.b16 %v549
    %v1147 = vunpack.c.l.b16 %v550
    %v1148 = vunpack.c.h.b16 %v550
    %v1149 = vunpack.c.l.b16 %v551
    %v1150 = vunpack.c.h.b16 %v551
    %v1151 = vunpack.c.l.b16 %v552
    %v1152 = vunpack.c.h.b16 %v552
    %v1153 = vunpack.c.l.b16 %v553
    %v1154 = vunpack.c.l.b16 %v554
    %v1155 = vunpack.c.h.b16 %v554
    %v1156 = vunpack.c.l.b16 %v555
    %v1157 = vunpack.c.h.b16 %v555
    %v1158 = vunpack.c.l.b16 %v556
    %v1159 = vunpack.c.h.b16 %v556
    %v1160 = vunpack.c.l.b16 %v557
    %v1161 = vunpack.c.l.b16 %v558
    %v1162 = vunpack.c.h.b16 %v558
    %v1163 = vunpack.c.l.b16 %v559
    %v1164 = vunpack.c.h.b16 %v559
    %v1165 = vunpack.c.l.b16 %v560
    %v1166 = vunpack.c.h.b16 %v560
    %v1167 = vunpack.c.l.b16 %v561
    %v1168 = vunpack.c.l.b16 %v562
    %v1169 = vunpack.c.h.b16 %v562
    %v1170 = vunpack.c.l.b16 %v563
    %v1171 = vunpack.c.h.b16 %v563
    %v1172 = vunpack.c.l.b16 %v564
    %v1173 = vunpack.c.h.b16 %v564
    %v1174 = vunpack.c.l.b16 %v565
    %v1175 = vunpack.c.l.b16 %v566
    %v1176 = vunpack.c.h.b16 %v566
    %v1177 = vunpack.c.l.b16 %v567
    %v1178 = vunpack.c.h.b16 %v567
    %v1179 = vunpack.c.l.b16 %v568
    %v1180 = vunpack.c.h.b16 %v568
    %v1181 = vunpack.c.l.b16 %v569
    %v1182 = vunpack.c.l.b16 %v570
    %v1183 = vunpack.c.h.b16 %v570
    %v1184 = vunpack.c.l.b16 %v571
    %v1185 = vunpack.c.h.b16 %v571
    %v1186 = vunpack.c.l.b16 %v572
    %v1187 = vunpack.c.h.b16 %v572
    %v1188 = vunpack.c.l.b16 %v573
    %v1189 = vunpack.c.l.b16 %v574
    %v1190 = vunpack.c.h.b16 %v574
    %v1191 = vunpack.c.l.b16 %v575
    %v1192 = vunpack.c.h.b16 %v575
    %v1193 = vunpack.c.l.b16 %v576
    %v1194 = vunpack.c.h.b16 %v576
    %v1195 = vunpack.c.l.b16 %v577
    %v1196 = vunpack.c.l.b16 %v578
    %v1197 = vunpack.c.h.b16 %v578
    %v1198 = vunpack.c.l.b16 %v579
    %v1199 = vunpack.c.h.b16 %v579
    %v1200 = vunpack.c.l.b16 %v580
    %v1201 = vunpack.c.h.b16 %v580
    %v1202 = vunpack.c.l.b16 %v581
    %v1203 = vunpack.c.l.b16 %v582
    %v1204 = vunpack.c.h.b16 %v582
    %v1205 = vunpack.c.l.b16 %v583
    %v1206 = vunpack.c.h.b16 %v583
    %v1207 = vunpack.c.l.b16 %v584
    %v1208 = vunpack.c.h.b16 %v584
    %v1209 = vunpack.c.l.b16 %v585
    %v1210 = vunpack.c.l.b16 %v586
    %v1211 = vunpack.c.h.b16 %v586
    %v1212 = vunpack.c.l.b16 %v587
    %v1213 = vunpack.c.h.b16 %v587
    %v1214 = vunpack.c.l.b16 %v588
    %v1215 = vunpack.c.h.b16 %v588
    %v1216 = vunpack.c.l.b16 %v589
    %v1217 = vunpack.c.l.b16 %v590
    %v1218 = vunpack.c.h.b16 %v590
    %v1219 = vunpack.c.l.b16 %v591
    %v1220 = vunpack.c.h.b16 %v591
    %v1221 = vunpack.c.l.b16 %v592
    %v1222 = vunpack.c.h.b16 %v592
    %v1223 = vunpack.c.l.b16 %v593
    %v1224 = vunpack.c.l.b16 %v594
    %v1225 = vunpack.c.h.b16 %v594
    %v1226 = vunpack.c.l.b16 %v595
    %v1227 = vunpack.c.h.b16 %v595
    %v1228 = vunpack.c.l.b16 %v596
    %v1229 = vunpack.c.h.b16 %v596
    %v1230 = vunpack.c.l.b16 %v597
    %v1231 = vunpack.c.l.b16 %v598
    %v1232 = vunpack.c.h.b16 %v598
    %v1233 = vunpack.c.l.b16 %v599
    %v1234 = vunpack.c.h.b16 %v599
    %v1235 = vunpack.c.l.b16 %v600
    %v1236 = vunpack.c.h.b16 %v600
    %v1237 = vunpack.c.l.b16 %v601
    %v1238 = vunpack.c.l.b16 %v602
    %v1239 = vunpack.c.h.b16 %v602
    %v1240 = vunpack.c.l.b16 %v603
    %v1241 = vunpack.c.h.b16 %v603
    %v1242 = vunpack.c.l.b16 %v604
    %v1243 = vunpack.c.h.b16 %v604
    %v1244 = vunpack.c.l.b16 %v605
    %v1245 = vunpack.c.l.b16 %v606
    %v1246 = vunpack.c.h.b16 %v606
    %v1247 = vunpack.c.l.b16 %v607
    %v1248 = vunpack.c.h.b16 %v607
    %v1249 = vunpack.c.l.b16 %v608
    %v1250 = vunpack.c.h.b16 %v608
    %v1251 = vunpack.c.l.b16 %v609
    %v1252 = vunpack.c.l.b16 %v610
    %v1253 = vunpack.c.h.b16 %v610
    %v1254 = vunpack.c.l.b16 %v611
    %v1255 = vunpack.c.h.b16 %v611
    %v1256 = vunpack.c.l.b16 %v612
    %v1257 = vunpack.c.h.b16 %v612
    %v1258 = vunpack.c.l.b16 %v613
    %v1259 = vunpack.c.l.b16 %v614
    %v1260 = vunpack.c.h.b16 %v614
    %v1261 = vunpack.c.l.b16 %v615
    %v1262 = vunpack.c.h.b16 %v615
    %v1263 = vunpack.c.l.b16 %v616
    %v1264 = vunpack.c.h.b16 %v616
    %v1265 = vunpack.c.l.b16 %v617
    %v1266 = vunpack.c.l.b16 %v618
    %v1267 = vunpack.c.h.b16 %v618
    %v1268 = vunpack.c.l.b16 %v619
    %v1269 = vunpack.c.h.b16 %v619
    %v1270 = vunpack.c.l.b16 %v620
    %v1271 = vunpack.c.h.b16 %v620
    %v1272 = vunpack.c.l.b16 %v621
    %v1273 = vunpack.c.l.b16 %v622
    %v1274 = vunpack.c.h.b16 %v622
    %v1275 = vunpack.c.l.b16 %v623
    %v1276 = vunpack.c.h.b16 %v623
    %v1277 = vunpack.c.l.b16 %v624
    %v1278 = vunpack.c.h.b16 %v624
    %v1279 = vunpack.c.l.b16 %v625
    %v1280 = vunpack.c.l.b16 %v626
    %v1281 = vunpack.c.h.b16 %v626
    %v1282 = vunpack.c.l.b16 %v627
    %v1283 = vunpack.c.h.b16 %v627
    %v1284 = vunpack.c.l.b16 %v628
    %v1285 = vunpack.c.h.b16 %v628
    %v1286 = vunpack.c.l.b16 %v629
    %v1287 = vunpack.c.l.b16 %v630
    %v1288 = vunpack.c.h.b16 %v630
    %v1289 = vunpack.c.l.b16 %v631
    %v1290 = vunpack.c.h.b16 %v631
    %v1291 = vunpack.c.l.b16 %v632
    %v1292 = vunpack.c.h.b16 %v632
    %v1293 = vunpack.c.l.b16 %v633
    %v1294 = vunpack.c.l.b16 %v634
    %v1295 = vunpack.c.h.b16 %v634
    %v1296 = vunpack.c.l.b16 %v635
    %v1297 = vunpack.c.h.b16 %v635
    %v1298 = vunpack.c.l.b16 %v636
    %v1299 = vunpack.c.h.b16 %v636
    %v1300 = vunpack.c.l.b16 %v637
    %v1301 = vunpack.c.l.b16 %v638
    %v1302 = vunpack.c.h.b16 %v638
    %v1303 = vunpack.c.l.b16 %v639
    %v1304 = vunpack.c.h.b16 %v639
    %v1305 = vunpack.c.l.b16 %v640
    %v1306 = vunpack.c.h.b16 %v640
    %v1307 = vunpack.c.l.b16 %v641
    %v1308 = vunpack.c.l.b16 %v642
    %v1309 = vunpack.c.h.b16 %v642
    %v1310 = vunpack.c.l.b16 %v643
    %v1311 = vunpack.c.h.b16 %v643
    %v1312 = vunpack.c.l.b16 %v644
    %v1313 = vunpack.c.h.b16 %v644
    %v1314 = vunpack.c.l.b16 %v645
    %v1315 = vunpack.c.l.b16 %v646
    %v1316 = vunpack.c.h.b16 %v646
    %v1317 = vunpack.c.l.b16 %v647
    %v1318 = vunpack.c.h.b16 %v647
    %v1319 = vunpack.c.l.b16 %v648
    %v1320 = vunpack.c.h.b16 %v648
    %v1321 = vunpack.c.l.b16 %v649
    %v1322 = vunpack.c.l.b16 %v650
    %v1323 = vunpack.c.h.b16 %v650
    %v1324 = vunpack.c.l.b16 %v651
    %v1325 = vunpack.c.h.b16 %v651
    %v1326 = vunpack.c.l.b16 %v652
    %v1327 = vunpack.c.h.b16 %v652
    %v1328 = vunpack.c.l.b16 %v653
    %v1329 = vunpack.c.l.b16 %v654
    %v1330 = vunpack.c.h.b16 %v654
    %v1331 = vunpack.c.l.b16 %v655
    %v1332 = vunpack.c.h.b16 %v655
    %v1333 = vunpack.c.l.b16 %v656
    %v1334 = vunpack.c.h.b16 %v656
    %v1335 = vunpack.c.l.b16 %v657
    %v1336 = vunpack.c.l.b16 %v658
    %v1337 = vunpack.c.h.b16 %v658
    %v1338 = vunpack.c.l.b16 %v659
    %v1339 = vunpack.c.h.b16 %v659
    %v1340 = vunpack.c.l.b16 %v660
    %v1341 = vunpack.c.h.b16 %v660
    %v1342 = vunpack.c.l.b16 %v661
    %v1343 = vunpack.c.l.b16 %v662
    %v1344 = vunpack.c.h.b16 %v662
    %v1345 = vunpack.c.l.b16 %v663
    %v1346 = vunpack.c.h.b16 %v663
    %v1347 = vunpack.c.l.b16 %v664
    %v1348 = vunpack.c.h.b16 %v664
    %v1349 = vunpack.c.l.b16 %v665
    %v1350 = vunpack.c.l.b16 %v666
    %v1351 = vunpack.c.h.b16 %v666
    %v1352 = vunpack.c.l.b16 %v667
    %v1353 = vunpack.c.h.b16 %v667
    %v1354 = vunpack.c.l.b16 %v668
    %v1355 = vunpack.c.h.b16 %v668
    %v1356 = vunpack.c.l.b16 %v669
    %v1357 = vunpack.c.l.b16 %v670
    %v1358 = vunpack.c.h.b16 %v670
    %v1359 = vunpack.c.l.b16 %v671
    %v1360 = vunpack.c.h.b16 %v671
    %v1361 = vunpack.c.l.b16 %v672
    %v1362 = vunpack.c.h.b16 %v672
    %v1363 = vunpack.c.l.b16 %v673
    %v1364 = vunpack.c.l.b16 %v674
    %v1365 = vunpack.c.h.b16 %v674
    %v1366 = vunpack.c.l.b16 %v675
    %v1367 = vunpack.c.h.b16 %v675
    %v1368 = vunpack.c.l.b16 %v676
    %v1369 = vunpack.c.h.b16 %v676
    %v1370 = vunpack.c.l.b16 %v677
    %v1371 = vunpack.c.l.b16 %v678
    %v1372 = vunpack.c.h.b16 %v678
    %v1373 = vunpack.c.l.b16 %v679
    %v1374 = vunpack.c.h.b16 %v679
    %v1375 = vunpack.c.l.b16 %v680
    %v1376 = vunpack.c.h.b16 %v680
    %v1377 = vunpack.c.l.b16 %v681
    %v1378 = vunpack.c.l.b16 %v682
    %v1379 = vunpack.c.h.b16 %v682
    %v1380 = vunpack.c.l.b16 %v683
    %v1381 = vunpack.c.h.b16 %v683
    %v1382 = vunpack.c.l.b16 %v684
    %v1383 = vunpack.c.h.b16 %v684
    %v1384 = vunpack.c.l.b16 %v685
    %v1385 = vunpack.c.l.b16 %v686
    %v1386 = vunpack.c.h.b16 %v686
    %v1387 = vunpack.c.l.b16 %v687
    %v1388 = vunpack.c.h.b16 %v687
    %v1389 = vunpack.c.l.b16 %v688
    %v1390 = vunpack.c.h.b16 %v688
    %v1391 = vunpack.c.l.b16 %v689
    %v1392 = vunpack.c.l.b16 %v690
    %v1393 = vunpack.c.h.b16 %v690
    %v1394 = vunpack.c.l.b16 %v691
    %v1395 = vunpack.c.h.b16 %v691
    %v1396 = vunpack.c.l.b16 %v692
    %v1397 = vunpack.c.h.b16 %v692
    %v1398 = vunpack.c.l.b16 %v693
    %v1399 = vunpack.c.l.b16 %v694
    %v1400 = vunpack.c.h.b16 %v694
    %v1401 = vunpack.c.l.b16 %v695
    %v1402 = vunpack.c.h.b16 %v695
    %v1403 = vunpack.c.l.b16 %v696
    %v1404 = vunpack.c.h.b16 %v696
    %v1405 = vunpack.c.l.b16 %v697
    %v1406 = vunpack.c.l.b16 %v698
    %v1407 = vunpack.c.h.b16 %v698
    %v1408 = vunpack.c.l.b16 %v699
    %v1409 = vunpack.c.h.b16 %v699
    %v1410 = vunpack.c.l.b16 %v700
    %v1411 = vunpack.c.h.b16 %v700
    %v1412 = vunpack.c.l.b16 %v701
    %v1413 = vunpack.c.l.b16 %v702
    %v1414 = vunpack.c.h.b16 %v702
    %v1415 = vunpack.c.l.b16 %v703
    %v1416 = vunpack.c.h.b16 %v703
    %v1417 = vunpack.c.l.b16 %v704
    %v1418 = vunpack.c.h.b16 %v704
    %v1419 = vunpack.c.l.b16 %v705
    %v1420 = vunpack.c.l.b16 %v706
    %v1421 = vunpack.c.h.b16 %v706
    %v1422 = vunpack.c.l.b16 %v707
    %v1423 = vunpack.c.h.b16 %v707
    %v1424 = vunpack.c.l.b16 %v708
    %v1425 = vunpack.c.h.b16 %v708
    %v1426 = vunpack.c.l.b16 %v709
    %v1427 = vunpack.c.l.b16 %v710
    %v1428 = vunpack.c.h.b16 %v710
    %v1429 = vunpack.c.l.b16 %v711
    %v1430 = vunpack.c.h.b16 %v711
    %v1431 = vunpack.c.l.b16 %v712
    %v1432 = vunpack.c.h.b16 %v712
    %v1433 = vunpack.c.l.b16 %v713
    %v1434 = vunpack.c.l.b16 %v714
    %v1435 = vunpack.c.h.b16 %v714
    %v1436 = vunpack.c.l.b16 %v715
    %v1437 = vunpack.c.h.b16 %v715
    %v1438 = vunpack.c.l.b16 %v716
    %v1439 = vunpack.c.h.b16 %v716
    %v1440 = vunpack.c.l.b16 %v717
    %v1441 = vunpack.c.l.b16 %v718
    %v1442 = vunpack.c.h.b16 %v718
    %v1443 = vunpack.c.l.b16 %v719
    %v1444 = vunpack.c.h.b16 %v719
    %v1445 = vunpack.c.l.b16 %v720
    %v1446 = vunpack.c.h.b16 %v720
    %v1447 = vunpack.c.l.b16 %v721
    %v1448 = vunpack.c.l.b16 %v722
    %v1449 = vunpack.c.h.b16 %v722
    %v1450 = vunpack.c.l.b16 %v723
    %v1451 = vunpack.c.h.b16 %v723
    %v1452 = vunpack.c.l.b16 %v724
    %v1453 = vunpack.c.h.b16 %v724
    %v1454 = vunpack.c.l.b16 %v725
    %v1455 = vunpack.c.l.b16 %v726
    %v1456 = vunpack.c.h.b16 %v726
    %v1457 = vunpack.c.l.b16 %v727
    %v1458 = vunpack.c.h.b16 %v727
    %v1459 = vunpack.c.l.b16 %v728
    %v1460 = vunpack.c.h.b16 %v728
    %v1461 = vunpack.c.l.b16 %v729
    %v1462 = vunpack.c.l.b16 %v730
    %v1463 = vunpack.c.h.b16 %v730
    %v1464 = vunpack.c.l.b16 %v731
    %v1465 = vunpack.c.h.b16 %v731
    %v1466 = vunpack.c.l.b16 %v732
    %v1467 = vunpack.c.h.b16 %v732
    %v1468 = vunpack.c.l.b16 %v733
    %v1469 = vunpack.c.l.b16 %v734
    %v1470 = vunpack.c.h.b16 %v734
    %v1471 = vunpack.c.l.b16 %v735
    %v1472 = vunpack.c.h.b16 %v735
    %v1473 = vunpack.c.l.b16 %v736
    %v1474 = vunpack.c.h.b16 %v736
    %v1475 = vunpack.c.l.b16 %v737
    %v1476 = vunpack.c.l.b16 %v738
    %v1477 = vunpack.c.h.b16 %v738
    %v1478 = vunpack.c.l.b16 %v739
    %v1479 = vunpack.c.h.b16 %v739
    %v1480 = vunpack.c.l.b16 %v740
    %v1481 = vunpack.c.h.b16 %v740
    %v1482 = vunpack.c.l.b16 %v741
    %v1483 = vpack.c.b16 %v1042, %v1035
    %v1484 = vpack.c.b16 %v1043, %v1036
    %v1485 = vpack.c.b16 %v1044, %v1037
    %v1486 = vpack.c.b16 %v1045, %v1038
    %v1487 = vpack.c.b16 %v1046, %v1039
    %v1488 = vpack.c.b16 %v1047, %v1040
    %v1489 = vpack.c.b16 %v1048, %v1041
    %v1490 = vpack.c.b16 %v1056, %v1049
    %v1491 = vpack.c.b16 %v1057, %v1050
    %v1492 = vpack.c.b16 %v1058, %v1051
    %v1493 = vpack.c.b16 %v1059, %v1052
    %v1494 = vpack.c.b16 %v1060, %v1053
    %v1495 = vpack.c.b16 %v1061, %v1054
    %v1496 = vpack.c.b16 %v1062, %v1055
    %v1497 = vpack.c.b16 %v1070, %v1063
    %v1498 = vpack.c.b16 %v1071, %v1064
    %v1499 = vpack.c.b16 %v1072, %v1065
    %v1500 = vpack.c.b16 %v1073, %v1066
    %v1501 = vpack.c.b16 %v1074, %v1067
    %v1502 = vpack.c.b16 %v1075, %v1068
    %v1503 = vpack.c.b16 %v1076, %v1069
    %v1504 = vpack.c.b16 %v1084, %v1077
    %v1505 = vpack.c.b16 %v1085, %v1078
    %v1506 = vpack.c.b16 %v1086, %v1079
    %v1507 = vpack.c.b16 %v1087, %v1080
    %v1508 = vpack.c.b16 %v1088, %v1081
    %v1509 = vpack.c.b16 %v1089, %v1082
    %v1510 = vpack.c.b16 %v1090, %v1083
    %v1511 = vpack.c.b16 %v1098, %v1091
    %v1512 = vpack.c.b16 %v1099, %v1092
    %v1513 = vpack.c.b16 %v1100, %v1093
    %v1514 = vpack.c.b16 %v1101, %v1094
    %v1515 = vpack.c.b16 %v1102, %v1095
    %v1516 = vpack.c.b16 %v1103, %v1096
    %v1517 = vpack.c.b16 %v1104, %v1097
    %v1518 = vpack.c.b16 %v1112, %v1105
    %v1519 = vpack.c.b16 %v1113, %v1106
    %v1520 = vpack.c.b16 %v1114, %v1107
    %v1521 = vpack.c.b16 %v1115, %v1108
    %v1522 = vpack.c.b16 %v1116, %v1109
    %v1523 = vpack.c.b16 %v1117, %v1110
    %v1524 = vpack.c.b16 %v1118, %v1111
    %v1525 = vpack.c.b16 %v1126, %v1119
    %v1526 = vpack.c.b16 %v1127, %v1120
    %v1527 = vpack.c.b16 %v1128, %v1121
    %v1528 = vpack.c.b16 %v1129, %v1122
    %v1529 = vpack.c.b16 %v1130, %v1123
    %v1530 = vpack.c.b16 %v1131, %v1124
    %v1531 = vpack.c.b16 %v1132, %v1125
    %v1532 = vpack.c.b16 %v1140, %v1133
    %v1533 = vpack.c.b16 %v1141, %v1134
    %v1534 = vpack.c.b16 %v1142, %v1135
    %v1535 = vpack.c.b16 %v1143, %v1136
    %v1536 = vpack.c.b16 %v1144, %v1137
    %v1537 = vpack.c.b16 %v1145, %v1138
    %v1538 = vpack.c.b16 %v1146, %v1139
    %v1539 = vpack.c.b16 %v1154, %v1147
    %v1540 = vpack.c.b16 %v1155, %v1148
    %v1541 = vpack.c.b16 %v1156, %v1149
    %v1542 = vpack.c.b16 %v1157, %v1150
    %v1543 = vpack.c.b16 %v1158, %v1151
    %v1544 = vpack.c.b16 %v1159, %v1152
    %v1545 = vpack.c.b16 %v1160, %v1153
    %v1546 = vpack.c.b16 %v1168, %v1161
    %v1547 = vpack.c.b16 %v1169, %v1162
    %v1548 = vpack.c.b16 %v1170, %v1163
    %v1549 = vpack.c.b16 %v1171, %v1164
    %v1550 = vpack.c.b16 %v1172, %v1165
    %v1551 = vpack.c.b16 %v1173, %v1166
    %v1552 = vpack.c.b16 %v1174, %v1167
    %v1553 = vpack.c.b16 %v1182, %v1175
    %v1554 = vpack.c.b16 %v1183, %v1176
    %v1555 = vpack.c.b16 %v1184, %v1177
    %v1556 = vpack.c.b16 %v1185, %v1178
    %v1557 = vpack.c.b16 %v1186, %v1179
    %v1558 = vpack.c.b16 %v1187, %v1180
    %v1559 = vpack.c.b16 %v1188, %v1181
    %v1560 = vpack.c.b16 %v1196, %v1189
    %v1561 = vpack.c.b16 %v1197, %v1190
    %v1562 = vpack.c.b16 %v1198, %v1191
    %v1563 = vpack.c.b16 %v1199, %v1192
    %v1564 = vpack.c.b16 %v1200, %v1193
    %v1565 = vpack.c.b16 %v1201, %v1194
    %v1566 = vpack.c.b16 %v1202, %v1195
    %v1567 = vpack.c.b16 %v1210, %v1203
    %v1568 = vpack.c.b16 %v1211, %v1204
    %v1569 = vpack.c.b16 %v1212, %v1205
    %v1570 = vpack.c.b16 %v1213, %v1206
    %v1571 = vpack.c.b16 %v1214, %v1207
    %v1572 = vpack.c.b16 %v1215, %v1208
    %v1573 = vpack.c.b16 %v1216, %v1209
    %v1574 = vpack.c.b16 %v1224, %v1217
    %v1575 = vpack.c.b16 %v1225, %v1218
    %v1576 = vpack.c.b16 %v1226, %v1219
    %v1577 = vpack.c.b16 %v1227, %v1220
    %v1578 = vpack.c.b16 %v1228, %v1221
    %v1579 = vpack.c.b16 %v1229, %v1222
    %v1580 = vpack.c.b16 %v1230, %v1223
    %v1581 = vpack.c.b16 %v1238, %v1231
    %v1582 = vpack.c.b16 %v1239, %v1232
    %v1583 = vpack.c.b16 %v1240, %v1233
    %v1584 = vpack.c.b16 %v1241, %v1234
    %v1585 = vpack.c.b16 %v1242, %v1235
    %v1586 = vpack.c.b16 %v1243, %v1236
    %v1587 = vpack.c.b16 %v1244, %v1237
    %v1588 = vpack.c.b16 %v1252, %v1245
    %v1589 = vpack.c.b16 %v1253, %v1246
    %v1590 = vpack.c.b16 %v1254, %v1247
    %v1591 = vpack.c.b16 %v1255, %v1248
    %v1592 = vpack.c.b16 %v1256, %v1249
    %v1593 = vpack.c.b16 %v1257, %v1250
    %v1594 = vpack.c.b16 %v1258, %v1251
    %v1595 = vpack.c.b16 %v1266, %v1259
    %v1596 = vpack.c.b16 %v1267, %v1260
    %v1597 = vpack.c.b16 %v1268, %v1261
    %v1598 = vpack.c.b16 %v1269, %v1262
    %v1599 = vpack.c.b16 %v1270, %v1263
    %v1600 = vpack.c.b16 %v1271, %v1264
    %v1601 = vpack.c.b16 %v1272, %v1265
    %v1602 = vpack.c.b16 %v1280, %v1273
    %v1603 = vpack.c.b16 %v1281, %v1274
    %v1604 = vpack.c.b16 %v1282, %v1275
    %v1605 = vpack.c.b16 %v1283, %v1276
    %v1606 = vpack.c.b16 %v1284, %v1277
    %v1607 = vpack.c.b16 %v1285, %v1278
    %v1608 = vpack.c.b16 %v1286, %v1279
    %v1609 = vpack.c.b16 %v1294, %v1287
    %v1610 = vpack.c.b16 %v1295, %v1288
    %v1611 = vpack.c.b16 %v1296, %v1289
    %v1612 = vpack.c.b16 %v1297, %v1290
    %v1613 = vpack.c.b16 %v1298, %v1291
    %v1614 = vpack.c.b16 %v1299, %v1292
    %v1615 = vpack.c.b16 %v1300, %v1293
    %v1616 = vpack.c.b16 %v1308, %v1301
    %v1617 = vpack.c.b16 %v1309, %v1302
    %v1618 = vpack.c.b16 %v1310, %v1303
    %v1619 = vpack.c.b16 %v1311, %v1304
    %v1620 = vpack.c.b16 %v1312, %v1305
    %v1621 = vpack.c.b16 %v1313, %v1306
    %v1622 = vpack.c.b16 %v1314, %v1307
    %v1623 = vpack.c.b16 %v1322, %v1315
    %v1624 = vpack.c.b16 %v1323, %v1316
    %v1625 = vpack.c.b16 %v1324, %v1317
    %v1626 = vpack.c.b16 %v1325, %v1318
    %v1627 = vpack.c.b16 %v1326, %v1319
    %v1628 = vpack.c.b16 %v1327, %v1320
    %v1629 = vpack.c.b16 %v1328, %v1321
    %v1630 = vpack.c.b16 %v1336, %v1329
    %v1631 = vpack.c.b16 %v1337, %v1330
    %v1632 = vpack.c.b16 %v1338, %v1331
    %v1633 = vpack.c.b16 %v1339, %v1332
    %v1634 = vpack.c.b16 %v1340, %v1333
    %v1635 = vpack.c.b16 %v1341, %v1334
    %v1636 = vpack.c.b16 %v1342, %v1335
    %v1637 = vpack.c.b16 %v1350, %v1343
    %v1638 = vpack.c.b16 %v1351, %v1344
    %v1639 = vpack.c.b16 %v1352, %v1345
    %v1640 = vpack.c.b16 %v1353, %v1346
    %v1641 = vpack.c.b16 %v1354, %v1347
    %v1642 = vpack.c.b16 %v1355, %v1348
    %v1643 = vpack.c.b16 %v1356, %v1349
    %v1644 = vpack.c.b16 %v1364, %v1357
    %v1645 = vpack.c.b16 %v1365, %v1358
    %v1646 = vpack.c.b16 %v1366, %v1359
    %v1647 = vpack.c.b16 %v1367, %v1360
    %v1648 = vpack.c.b16 %v1368, %v1361
    %v1649 = vpack.c.b16 %v1369, %v1362
    %v1650 = vpack.c.b16 %v1370, %v1363
    %v1651 = vpack.c.b16 %v1378, %v1371
    %v1652 = vpack.c.b16 %v1379, %v1372
    %v1653 = vpack.c.b16 %v1380, %v1373
    %v1654 = vpack.c.b16 %v1381, %v1374
    %v1655 = vpack.c.b16 %v1382, %v1375
    %v1656 = vpack.c.b16 %v1383, %v1376
    %v1657 = vpack.c.b16 %v1384, %v1377
    %v1658 = vpack.c.b16 %v1392, %v1385
    %v1659 = vpack.c.b16 %v1393, %v1386
    %v1660 = vpack.c.b16 %v1394, %v1387
    %v1661 = vpack.c.b16 %v1395, %v1388
    %v1662 = vpack.c.b16 %v1396, %v1389
    %v1663 = vpack.c.b16 %v1397, %v1390
    %v1664 = vpack.c.b16 %v1398, %v1391
    %v1665 = vpack.c.b16 %v1406, %v1399
    %v1666 = vpack.c.b16 %v1407, %v1400
    %v1667 = vpack.c.b16 %v1408, %v1401
    %v1668 = vpack.c.b16 %v1409, %v1402
    %v1669 = vpack.c.b16 %v1410, %v1403
    %v1670 = vpack.c.b16 %v1411, %v1404
    %v1671 = vpack.c.b16 %v1412, %v1405
    %v1672 = vpack.c.b16 %v1420, %v1413
    %v1673 = vpack.c.b16 %v1421, %v1414
    %v1674 = vpack.c.b16 %v1422, %v1415
    %v1675 = vpack.c.b16 %v1423, %v1416
    %v1676 = vpack.c.b16 %v1424, %v1417
    %v1677 = vpack.c.b16 %v1425, %v1418
    %v1678 = vpack.c.b16 %v1426, %v1419
    %v1679 = vpack.c.b16 %v1434, %v1427
    %v1680 = vpack.c.b16 %v1435, %v1428
    %v1681 = vpack.c.b16 %v1436, %v1429
    %v1682 = vpack.c.b16 %v1437, %v1430
    %v1683 = vpack.c.b16 %v1438, %v1431
    %v1684 = vpack.c.b16 %v1439, %v1432
    %v1685 = vpack.c.b16 %v1440, %v1433
    %v1686 = vpack.c.b16 %v1448, %v1441
    %v1687 = vpack.c.b16 %v1449, %v1442
    %v1688 = vpack.c.b16 %v1450, %v1443
    %v1689 = vpack.c.b16 %v1451, %v1444
    %v1690 = vpack.c.b16 %v1452, %v1445
    %v1691 = vpack.c.b16 %v1453, %v1446
    %v1692 = vpack.c.b16 %v1454, %v1447
    %v1693 = vpack.c.b16 %v1462, %v1455
    %v1694 = vpack.c.b16 %v1463, %v1456
    %v1695 = vpack.c.b16 %v1464, %v1457
    %v1696 = vpack.c.b16 %v1465, %v1458
    %v1697 = vpack.c.b16 %v1466, %v1459
    %v1698 = vpack.c.b16 %v1467, %v1460
    %v1699 = vpack.c.b16 %v1468, %v1461
    %v1700 = vpack.c.b16 %v1476, %v1469
    %v1701 = vpack.c.b16 %v1477, %v1470
    %v1702 = vpack.c.b16 %v1478, %v1471
    %v1703 = vpack.c.b16 %v1479, %v1472
    %v1704 = vpack.c.b16 %v1480, %v1473
    %v1705 = vpack.c.b16 %v1481, %v1474
    %v1706 = vpack.c.b16 %v1482, %v1475
    %1931 = vmatprep.subr.bf16.mxu0 %v1484
    %1932 = vmatpush1.bf16.msra.mxu0 %v1483
    %1933 = vmatprep.subr.bf16.mxu0 %v1491
    %1934 = vmatpush1.bf16.msra.mxu0 %v1490
    %1935 = vmatprep.subr.bf16.mxu0 %v1498
    %1936 = vmatpush1.bf16.msra.mxu0 %v1497
    %1937 = vmatprep.subr.bf16.mxu0 %v1505
    %1938 = vmatpush1.bf16.msra.mxu0 %v1504
    %1939 = vmatprep.subr.bf16.mxu0 %v1512
    %1940 = vmatpush1.bf16.msra.mxu0 %v1511
    %1941 = vmatprep.subr.bf16.mxu0 %v1519
    %1942 = vmatpush1.bf16.msra.mxu0 %v1518
    %1943 = vmatprep.subr.bf16.mxu0 %v1526
    %1944 = vmatpush1.bf16.msra.mxu0 %v1525
    %1945 = vmatprep.subr.bf16.mxu0 %v1533
    %1946 = vmatpush1.bf16.msra.mxu0 %v1532
    %1947 = vmatprep.subr.bf16.mxu0 %v1540
    %1948 = vmatpush1.bf16.msra.mxu0 %v1539
    %1949 = vmatprep.subr.bf16.mxu0 %v1547
    %1950 = vmatpush1.bf16.msra.mxu0 %v1546
    %1951 = vmatprep.subr.bf16.mxu0 %v1554
    %1952 = vmatpush1.bf16.msra.mxu0 %v1553
    %1953 = vmatprep.subr.bf16.mxu0 %v1561
    %1954 = vmatpush1.bf16.msra.mxu0 %v1560
    %1955 = vmatprep.subr.bf16.mxu0 %v1568
    %1956 = vmatpush1.bf16.msra.mxu0 %v1567
    %1957 = vmatprep.subr.bf16.mxu0 %v1575
    %1958 = vmatpush1.bf16.msra.mxu0 %v1574
    %1959 = vmatprep.subr.bf16.mxu0 %v1582
    %1960 = vmatpush1.bf16.msra.mxu0 %v1581
    %1961 = vmatprep.subr.bf16.mxu0 %v1589
    %1962 = vmatpush1.bf16.msra.mxu0 %v1588
    %1963 = vmatprep.mubr.bf16.mxu0 %v483
    %1964 = vmatmul.mubr.bf16.gmra.mrb[0].mxu0 %v482
    %v1965 = vpop.f32.mrb[0].mxu0
    %v1966 = vadd.f32 %v747, %v1965
    %v1967 = vpop.f32.mrb[0].mxu0
    %v1968 = vadd.f32 %v751, %v1967
    %v1969 = vpop.f32.mrb[0].mxu0
    %v1970 = vpop.f32.mrb[0].mxu0
    %1971 = vdwg.mxu0
    %1972 = vmatprep.subr.bf16.mxu0 %v1596
    %1973 = vmatpush1.bf16.msra.mxu0 %v1595
    %1974 = vmatprep.subr.bf16.mxu0 %v1603
    %1975 = vmatpush1.bf16.msra.mxu0 %v1602
    %1976 = vmatprep.subr.bf16.mxu0 %v1610
    %1977 = vmatpush1.bf16.msra.mxu0 %v1609
    %1978 = vmatprep.subr.bf16.mxu0 %v1617
    %1979 = vmatpush1.bf16.msra.mxu0 %v1616
    %1980 = vmatprep.subr.bf16.mxu0 %v1624
    %1981 = vmatpush1.bf16.msra.mxu0 %v1623
    %1982 = vmatprep.subr.bf16.mxu0 %v1631
    %1983 = vmatpush1.bf16.msra.mxu0 %v1630
    %1984 = vmatprep.subr.bf16.mxu0 %v1638
    %1985 = vmatpush1.bf16.msra.mxu0 %v1637
    %1986 = vmatprep.subr.bf16.mxu0 %v1645
    %1987 = vmatpush1.bf16.msra.mxu0 %v1644
    %1988 = vmatprep.subr.bf16.mxu0 %v1652
    %1989 = vmatpush1.bf16.msra.mxu0 %v1651
    %1990 = vmatprep.subr.bf16.mxu0 %v1659
    %1991 = vmatpush1.bf16.msra.mxu0 %v1658
    %1992 = vmatprep.subr.bf16.mxu0 %v1666
    %1993 = vmatpush1.bf16.msra.mxu0 %v1665
    %1994 = vmatprep.subr.bf16.mxu0 %v1673
    %1995 = vmatpush1.bf16.msra.mxu0 %v1672
    %1996 = vmatprep.subr.bf16.mxu0 %v1680
    %1997 = vmatpush1.bf16.msra.mxu0 %v1679
    %1998 = vmatprep.subr.bf16.mxu0 %v1687
    %1999 = vmatpush1.bf16.msra.mxu0 %v1686
    %2000 = vmatprep.subr.bf16.mxu0 %v1694
    %2001 = vmatpush1.bf16.msra.mxu0 %v1693
    %2002 = vmatprep.subr.bf16.mxu0 %v1701
    %2003 = vmatpush1.bf16.msra.mxu0 %v1700
    %2004 = vmatprep.mubr.bf16.mxu0 %v485
    %2005 = vmatmul.mubr.bf16.gmra.mrb[0].mxu0 %v484
    %v2006 = vpop.f32.mrb[0].mxu0
    %v2007 = vadd.f32 %v1966, %v2006
    %v2008 = vpop.f32.mrb[0].mxu0
    %v2009 = vadd.f32 %v1968, %v2008
    %v2010 = vpop.f32.mrb[0].mxu0
    %v2011 = vpop.f32.mrb[0].mxu0
    %2012 = vdwg.mxu0
    %2013 = vmatprep.subr.bf16.mxu0 %v1486
    %2014 = vmatpush1.bf16.msra.mxu0 %v1485
    %2015 = vmatprep.subr.bf16.mxu0 %v1493
    %2016 = vmatpush1.bf16.msra.mxu0 %v1492
    %2017 = vmatprep.subr.bf16.mxu0 %v1500
    %2018 = vmatpush1.bf16.msra.mxu0 %v1499
    %2019 = vmatprep.subr.bf16.mxu0 %v1507
    %2020 = vmatpush1.bf16.msra.mxu0 %v1506
    %2021 = vmatprep.subr.bf16.mxu0 %v1514
    %2022 = vmatpush1.bf16.msra.mxu0 %v1513
    %2023 = vmatprep.subr.bf16.mxu0 %v1521
    %2024 = vmatpush1.bf16.msra.mxu0 %v1520
    %2025 = vmatprep.subr.bf16.mxu0 %v1528
    %2026 = vmatpush1.bf16.msra.mxu0 %v1527
    %2027 = vmatprep.subr.bf16.mxu0 %v1535
    %2028 = vmatpush1.bf16.msra.mxu0 %v1534
    %2029 = vmatprep.subr.bf16.mxu0 %v1542
    %2030 = vmatpush1.bf16.msra.mxu0 %v1541
    %2031 = vmatprep.subr.bf16.mxu0 %v1549
    %2032 = vmatpush1.bf16.msra.mxu0 %v1548
    %2033 = vmatprep.subr.bf16.mxu0 %v1556
    %2034 = vmatpush1.bf16.msra.mxu0 %v1555
    %2035 = vmatprep.subr.bf16.mxu0 %v1563
    %2036 = vmatpush1.bf16.msra.mxu0 %v1562
    %2037 = vmatprep.subr.bf16.mxu0 %v1570
    %2038 = vmatpush1.bf16.msra.mxu0 %v1569
    %2039 = vmatprep.subr.bf16.mxu0 %v1577
    %2040 = vmatpush1.bf16.msra.mxu0 %v1576
    %2041 = vmatprep.subr.bf16.mxu0 %v1584
    %2042 = vmatpush1.bf16.msra.mxu0 %v1583
    %2043 = vmatprep.subr.bf16.mxu0 %v1591
    %2044 = vmatpush1.bf16.msra.mxu0 %v1590
    %2045 = vmatprep.mubr.bf16.mxu0 %v483
    %2046 = vmatmul.mubr.bf16.gmra.mrb[0].mxu0 %v482
    %v2047 = vpop.f32.mrb[0].mxu0
    %v2048 = vadd.f32 %v755, %v2047
    %v2049 = vpop.f32.mrb[0].mxu0
    %v2050 = vadd.f32 %v759, %v2049
    %v2051 = vpop.f32.mrb[0].mxu0
    %v2052 = vpop.f32.mrb[0].mxu0
    %2053 = vdwg.mxu0
    %2054 = vmatprep.subr.bf16.mxu0 %v1598
    %2055 = vmatpush1.bf16.msra.mxu0 %v1597
    %2056 = vmatprep.subr.bf16.mxu0 %v1605
    %2057 = vmatpush1.bf16.msra.mxu0 %v1604
    %2058 = vmatprep.subr.bf16.mxu0 %v1612
    %2059 = vmatpush1.bf16.msra.mxu0 %v1611
    %2060 = vmatprep.subr.bf16.mxu0 %v1619
    %2061 = vmatpush1.bf16.msra.mxu0 %v1618
    %2062 = vmatprep.subr.bf16.mxu0 %v1626
    %2063 = vmatpush1.bf16.msra.mxu0 %v1625
    %2064 = vmatprep.subr.bf16.mxu0 %v1633
    %2065 = vmatpush1.bf16.msra.mxu0 %v1632
    %2066 = vmatprep.subr.bf16.mxu0 %v1640
    %2067 = vmatpush1.bf16.msra.mxu0 %v1639
    %2068 = vmatprep.subr.bf16.mxu0 %v1647
    %2069 = vmatpush1.bf16.msra.mxu0 %v1646
    %2070 = vmatprep.subr.bf16.mxu0 %v1654
    %2071 = vmatpush1.bf16.msra.mxu0 %v1653
    %2072 = vmatprep.subr.bf16.mxu0 %v1661
    %2073 = vmatpush1.bf16.msra.mxu0 %v1660
    %2074 = vmatprep.subr.bf16.mxu0 %v1668
    %2075 = vmatpush1.bf16.msra.mxu0 %v1667
    %2076 = vmatprep.subr.bf16.mxu0 %v1675
    %2077 = vmatpush1.bf16.msra.mxu0 %v1674
    %2078 = vmatprep.subr.bf16.mxu0 %v1682
    %2079 = vmatpush1.bf16.msra.mxu0 %v1681
    %2080 = vmatprep.subr.bf16.mxu0 %v1689
    %2081 = vmatpush1.bf16.msra.mxu0 %v1688
    %2082 = vmatprep.subr.bf16.mxu0 %v1696
    %2083 = vmatpush1.bf16.msra.mxu0 %v1695
    %2084 = vmatprep.subr.bf16.mxu0 %v1703
    %2085 = vmatpush1.bf16.msra.mxu0 %v1702
    %2086 = vmatprep.mubr.bf16.mxu0 %v485
    %2087 = vmatmul.mubr.bf16.gmra.mrb[0].mxu0 %v484
    %v2088 = vpop.f32.mrb[0].mxu0
    %v2089 = vadd.f32 %v2048, %v2088
    %v2090 = vpop.f32.mrb[0].mxu0
    %v2091 = vadd.f32 %v2050, %v2090
    %v2092 = vpop.f32.mrb[0].mxu0
    %v2093 = vpop.f32.mrb[0].mxu0
    %2094 = vdwg.mxu0
    %2095 = vmatprep.subr.bf16.mxu0 %v1488
    %2096 = vmatpush1.bf16.msra.mxu0 %v1487
    %2097 = vmatprep.subr.bf16.mxu0 %v1495
    %2098 = vmatpush1.bf16.msra.mxu0 %v1494
    %2099 = vmatprep.subr.bf16.mxu0 %v1502
    %2100 = vmatpush1.bf16.msra.mxu0 %v1501
    %2101 = vmatprep.subr.bf16.mxu0 %v1509
    %2102 = vmatpush1.bf16.msra.mxu0 %v1508
    %2103 = vmatprep.subr.bf16.mxu0 %v1516
    %2104 = vmatpush1.bf16.msra.mxu0 %v1515
    %2105 = vmatprep.subr.bf16.mxu0 %v1523
    %2106 = vmatpush1.bf16.msra.mxu0 %v1522
    %2107 = vmatprep.subr.bf16.mxu0 %v1530
    %2108 = vmatpush1.bf16.msra.mxu0 %v1529
    %2109 = vmatprep.subr.bf16.mxu0 %v1537
    %2110 = vmatpush1.bf16.msra.mxu0 %v1536
    %2111 = vmatprep.subr.bf16.mxu0 %v1544
    %2112 = vmatpush1.bf16.msra.mxu0 %v1543
    %2113 = vmatprep.subr.bf16.mxu0 %v1551
    %2114 = vmatpush1.bf16.msra.mxu0 %v1550
    %2115 = vmatprep.subr.bf16.mxu0 %v1558
    %2116 = vmatpush1.bf16.msra.mxu0 %v1557
    %2117 = vmatprep.subr.bf16.mxu0 %v1565
    %2118 = vmatpush1.bf16.msra.mxu0 %v1564
    %2119 = vmatprep.subr.bf16.mxu0 %v1572
    %2120 = vmatpush1.bf16.msra.mxu0 %v1571
    %2121 = vmatprep.subr.bf16.mxu0 %v1579
    %2122 = vmatpush1.bf16.msra.mxu0 %v1578
    %2123 = vmatprep.subr.bf16.mxu0 %v1586
    %2124 = vmatpush1.bf16.msra.mxu0 %v1585
    %2125 = vmatprep.subr.bf16.mxu0 %v1593
    %2126 = vmatpush1.bf16.msra.mxu0 %v1592
    %2127 = vmatprep.mubr.bf16.mxu0 %v483
    %2128 = vmatmul.mubr.bf16.gmra.mrb[0].mxu0 %v482
    %v2129 = vpop.f32.mrb[0].mxu0
    %v2130 = vadd.f32 %v763, %v2129
    %v2131 = vpop.f32.mrb[0].mxu0
    %v2132 = vadd.f32 %v767, %v2131
    %v2133 = vpop.f32.mrb[0].mxu0
    %v2134 = vpop.f32.mrb[0].mxu0
    %2135 = vdwg.mxu0
    %2136 = vmatprep.subr.bf16.mxu0 %v1600
    %2137 = vmatpush1.bf16.msra.mxu0 %v1599
    %2138 = vmatprep.subr.bf16.mxu0 %v1607
    %2139 = vmatpush1.bf16.msra.mxu0 %v1606
    %2140 = vmatprep.subr.bf16.mxu0 %v1614
    %2141 = vmatpush1.bf16.msra.mxu0 %v1613
    %2142 = vmatprep.subr.bf16.mxu0 %v1621
    %2143 = vmatpush1.bf16.msra.mxu0 %v1620
    %2144 = vmatprep.subr.bf16.mxu0 %v1628
    %2145 = vmatpush1.bf16.msra.mxu0 %v1627
    %2146 = vmatprep.subr.bf16.mxu0 %v1635
    %2147 = vmatpush1.bf16.msra.mxu0 %v1634
    %2148 = vmatprep.subr.bf16.mxu0 %v1642
    %2149 = vmatpush1.bf16.msra.mxu0 %v1641
    %2150 = vmatprep.subr.bf16.mxu0 %v1649
    %2151 = vmatpush1.bf16.msra.mxu0 %v1648
    %2152 = vmatprep.subr.bf16.mxu0 %v1656
    %2153 = vmatpush1.bf16.msra.mxu0 %v1655
    %2154 = vmatprep.subr.bf16.mxu0 %v1663
    %2155 = vmatpush1.bf16.msra.mxu0 %v1662
    %2156 = vmatprep.subr.bf16.mxu0 %v1670
    %2157 = vmatpush1.bf16.msra.mxu0 %v1669
    %2158 = vmatprep.subr.bf16.mxu0 %v1677
    %2159 = vmatpush1.bf16.msra.mxu0 %v1676
    %2160 = vmatprep.subr.bf16.mxu0 %v1684
    %2161 = vmatpush1.bf16.msra.mxu0 %v1683
    %2162 = vmatprep.subr.bf16.mxu0 %v1691
    %2163 = vmatpush1.bf16.msra.mxu0 %v1690
    %2164 = vmatprep.subr.bf16.mxu0 %v1698
    %2165 = vmatpush1.bf16.msra.mxu0 %v1697
    %2166 = vmatprep.subr.bf16.mxu0 %v1705
    %2167 = vmatpush1.bf16.msra.mxu0 %v1704
    %2168 = vmatprep.mubr.bf16.mxu0 %v485
    %2169 = vmatmul.mubr.bf16.gmra.mrb[0].mxu0 %v484
    %v2170 = vpop.f32.mrb[0].mxu0
    %v2171 = vadd.f32 %v2130, %v2170
    %v2172 = vpop.f32.mrb[0].mxu0
    %v2173 = vadd.f32 %v2132, %v2172
    %v2174 = vpop.f32.mrb[0].mxu0
    %v2175 = vpop.f32.mrb[0].mxu0
    %2176 = vdwg.mxu0
    %2177 = vmatprep.subr.bf16.mxu0 0
    %2178 = vmatpush1.bf16.msra.mxu0 %v1489
    %2179 = vmatprep.subr.bf16.mxu0 0
    %2180 = vmatpush1.bf16.msra.mxu0 %v1496
    %2181 = vmatprep.subr.bf16.mxu0 0
    %2182 = vmatpush1.bf16.msra.mxu0 %v1503
    %2183 = vmatprep.subr.bf16.mxu0 0
    %2184 = vmatpush1.bf16.msra.mxu0 %v1510
    %2185 = vmatprep.subr.bf16.mxu0 0
    %2186 = vmatpush1.bf16.msra.mxu0 %v1517
    %2187 = vmatprep.subr.bf16.mxu0 0
    %2188 = vmatpush1.bf16.msra.mxu0 %v1524
    %2189 = vmatprep.subr.bf16.mxu0 0
    %2190 = vmatpush1.bf16.msra.mxu0 %v1531
    %2191 = vmatprep.subr.bf16.mxu0 0
    %2192 = vmatpush1.bf16.msra.mxu0 %v1538
    %2193 = vmatprep.subr.bf16.mxu0 0
    %2194 = vmatpush1.bf16.msra.mxu0 %v1545
    %2195 = vmatprep.subr.bf16.mxu0 0
    %2196 = vmatpush1.bf16.msra.mxu0 %v1552
    %2197 = vmatprep.subr.bf16.mxu0 0
    %2198 = vmatpush1.bf16.msra.mxu0 %v1559
    %2199 = vmatprep.subr.bf16.mxu0 0
    %2200 = vmatpush1.bf16.msra.mxu0 %v1566
    %2201 = vmatprep.subr.bf16.mxu0 0
    %2202 = vmatpush1.bf16.msra.mxu0 %v1573
    %2203 = vmatprep.subr.bf16.mxu0 0
    %2204 = vmatpush1.bf16.msra.mxu0 %v1580
    %2205 = vmatprep.subr.bf16.mxu0 0
    %2206 = vmatpush1.bf16.msra.mxu0 %v1587
    %2207 = vmatprep.subr.bf16.mxu0 0
    %2208 = vmatpush1.bf16.msra.mxu0 %v1594
    %2209 = vmatprep.mubr.bf16.mxu0 %v483
    %2210 = vmatmul.mubr.bf16.gmra.mrb[0].mxu0 %v482
    %v2211 = vpop.f32.mrb[0].mxu0
    %v2212 = vadd.f32 %v771, %v2211
    %v2213 = vpop.f32.mrb[0].mxu0
    %v2214 = vpop.f32.mrb[0].mxu0
    %v2215 = vpop.f32.mrb[0].mxu0
    %2216 = vdwg.mxu0
    %2217 = vmatprep.subr.bf16.mxu0 0
    %2218 = vmatpush1.bf16.msra.mxu0 %v1601
    %2219 = vmatprep.subr.bf16.mxu0 0
    %2220 = vmatpush1.bf16.msra.mxu0 %v1608
    %2221 = vmatprep.subr.bf16.mxu0 0
    %2222 = vmatpush1.bf16.msra.mxu0 %v1615
    %2223 = vmatprep.subr.bf16.mxu0 0
    %2224 = vmatpush1.bf16.msra.mxu0 %v1622
    %2225 = vmatprep.subr.bf16.mxu0 0
    %2226 = vmatpush1.bf16.msra.mxu0 %v1629
    %2227 = vmatprep.subr.bf16.mxu0 0
    %2228 = vmatpush1.bf16.msra.mxu0 %v1636
    %2229 = vmatprep.subr.bf16.mxu0 0
    %2230 = vmatpush1.bf16.msra.mxu0 %v1643
    %2231 = vmatprep.subr.bf16.mxu0 0
    %2232 = vmatpush1.bf16.msra.mxu0 %v1650
    %2233 = vmatprep.subr.bf16.mxu0 0
    %2234 = vmatpush1.bf16.msra.mxu0 %v1657
    %2235 = vmatprep.subr.bf16.mxu0 0
    %2236 = vmatpush1.bf16.msra.mxu0 %v1664
    %2237 = vmatprep.subr.bf16.mxu0 0
    %2238 = vmatpush1.bf16.msra.mxu0 %v1671
    %2239 = vmatprep.subr.bf16.mxu0 0
    %2240 = vmatpush1.bf16.msra.mxu0 %v1678
    %2241 = vmatprep.subr.bf16.mxu0 0
    %2242 = vmatpush1.bf16.msra.mxu0 %v1685
    %2243 = vmatprep.subr.bf16.mxu0 0
    %2244 = vmatpush1.bf16.msra.mxu0 %v1692
    %2245 = vmatprep.subr.bf16.mxu0 0
    %2246 = vmatpush1.bf16.msra.mxu0 %v1699
    %2247 = vmatprep.subr.bf16.mxu0 0
    %2248 = vmatpush1.bf16.msra.mxu0 %v1706
    %2249 = vmatprep.mubr.bf16.mxu0 %v485
    %2250 = vmatmul.mubr.bf16.gmra.mrb[0].mxu0 %v484
    %v2251 = vpop.f32.mrb[0].mxu0
    %v2252 = vadd.f32 %v2212, %v2251
    %v2253 = vpop.f32.mrb[0].mxu0
    %v2254 = vpop.f32.mrb[0].mxu0
    %v2255 = vpop.f32.mrb[0].mxu0
    %2256 = vdwg.mxu0
    %v2257 = vxor.u32 %v2007, 2147483648
    %v2258 = vxor.u32 %v2009, 2147483648
    %v2259 = vxor.u32 %v2089, 2147483648
    %v2260 = vxor.u32 %v2091, 2147483648
    %v2261 = vxor.u32 %v2171, 2147483648
    %v2262 = vxor.u32 %v2173, 2147483648
    %v2263 = vxor.u32 %v2252, 2147483648
    %v2264 = vmul.f32 %v2257, 1.442695
    %v2265 = vpow.pop %v2264
    %v2266 = vmul.f32 %v2258, 1.442695
    %v2267 = vpow.pop %v2266
    %v2268 = vmul.f32 %v2259, 1.442695
    %v2269 = vpow.pop %v2268
    %v2270 = vmul.f32 %v2260, 1.442695
    %v2271 = vpow.pop %v2270
    %v2272 = vmul.f32 %v2261, 1.442695
    %v2273 = vpow.pop %v2272
    %v2274 = vmul.f32 %v2262, 1.442695
    %v2275 = vpow.pop %v2274
    %v2276 = vmul.f32 %v2263, 1.442695
    %v2277 = vpow.pop %v2276
    %v2278 = vadd.f32 %v2265, 1.0
    %v2279 = vadd.f32 %v2267, 1.0
    %v2280 = vadd.f32 %v2269, 1.0
    %v2281 = vadd.f32 %v2271, 1.0
    %v2282 = vadd.f32 %v2273, 1.0
    %v2283 = vadd.f32 %v2275, 1.0
    %v2284 = vadd.f32 %v2277, 1.0
    %v2285 = vrcp.pop %v2278
    %v2286 = vmul.f32 1.0, %v2285
    %v2287 = vrcp.pop %v2279
    %v2288 = vmul.f32 1.0, %v2287
    %v2289 = vrcp.pop %v2280
    %v2290 = vmul.f32 1.0, %v2289
    %v2291 = vrcp.pop %v2281
    %v2292 = vmul.f32 1.0, %v2291
    %v2293 = vrcp.pop %v2282
    %v2294 = vmul.f32 1.0, %v2293
    %v2295 = vrcp.pop %v2283
    %v2296 = vmul.f32 1.0, %v2295
    %v2297 = vrcp.pop %v2284
    %v2298 = vmul.f32 1.0, %v2297
    %2299 = vst [vmem:[#allocation2] sm:$0xff] %v2286
    %2300 = vst [vmem:[#allocation2 + $0x8] sm:$0xff] %v2288
    %2301 = vst [vmem:[#allocation2 + $0x10] sm:$0xff] %v2290
    %2302 = vst [vmem:[#allocation2 + $0x18] sm:$0xff] %v2292
    %2303 = vst [vmem:[#allocation2 + $0x20] sm:$0xff] %v2294
    %2304 = vst [vmem:[#allocation2 + $0x28] sm:$0xff] %v2296
    %2305 = vst [vmem:[#allocation2 + $0x30] sm:$0xff] %v2298
    // Predicated region
    $region38: #{decoder_forward.1} parent=1 // pred_check
      _
    $region39: #{decoder_forward.1} parent=1 // pred_check_branch
      %2307 = sbr.rel (0) target = $region41
    $region40: #{decoder_forward.1} parent=1 // pred_region
      %s2309 = ssub.s32 896, 896
      %2310 = vsyncadd [#allocation3], %s2309
      %s2312 = sshll.u32 [#allocation2], 4
      %s2313 = int_to_ptr.vmem [resolvable:$true] %s2312
      %2315 = dma.vmem_to_hbm [thread:$0]  %s2313, 896, %s9, [#allocation3]
    $region41: #{decoder_forward.1} parent=1 // pred_fallthru
      _
    // Predicated region
    $region42: #{decoder_forward.1} parent=1 // pred_check
      _
    $region43: #{decoder_forward.1} parent=1 // pred_check_branch
      %2317 = sbr.rel (0) target = $region45
    $region44: #{decoder_forward.1} parent=1 // pred_region
      %2318 = dma.done [#allocation3], 896
    $region45: #{decoder_forward.1} parent=1 // pred_fallthru
      _
    %2319 = vsyncpa [#allocation3], 1

</llo_original>
